<compile_context>
chip_gen: v7x
topology: tpu7x:2x2x1
jax: 0.10.0
libtpu: 0.0.40
codegen_flags: <defaults>
</compile_context>

<pallas_src>
import functools

import numpy as np
import jax
import jax.numpy as jnp
from jax import lax
from jax.experimental import pallas as pl
from jax.experimental.pallas import tpu as pltpu

LN_EPS = 1e-5  # torch.nn.LayerNorm default


def _layernorm(x, gamma, beta):
    mean = jnp.mean(x, axis=-1, keepdims=True)
    var = jnp.mean((x - mean) ** 2, axis=-1, keepdims=True)
    return (x - mean) * lax.rsqrt(var + LN_EPS) * gamma + beta


# ----------------------------- kernels --------------------------------------

def stack_kernel(x_ref, cos_ref, sin_ref,
                 ln1g_ref, ln1b_ref, wqkv_ref, wp_ref, bp_ref,
                 ln2g_ref, ln2b_ref, w1_ref, b1_ref, w2_ref, b2_ref,
                 out_ref, *, num_heads):
    """One (batch, layer) grid step: x <- x + MHA(LN1(x)); x <- x + FFN(LN2(x)).

    The residual x lives in the output block, which has a constant block index
    along the layer axis -> VMEM-resident accumulator across all layers.
    """
    l = pl.program_id(1)

    @pl.when(l == 0)
    def _():
        out_ref[...] = x_ref[...]        # load embedding into the resident slab

    x = out_ref[0]                       # (T, C)
    T, C = x.shape
    hs = C // num_heads
    scale = hs ** -0.5

    # ---- attention sublayer --------------------------------------------------
    xln = _layernorm(x, ln1g_ref[0], ln1b_ref[0])
    # One lane-dense matmul for q / q_rot / k / k_rot / v of all heads.
    qkv = jnp.dot(xln, wqkv_ref[0], preferred_element_type=jnp.float32)  # (T, 5C)
    cosH = cos_ref[...]                  # (T, C): per-head pair-repeated cos
    sinH = sin_ref[...]
    q = (qkv[:, 0 * C:1 * C] * cosH + qkv[:, 1 * C:2 * C] * sinH) * scale
    k = qkv[:, 2 * C:3 * C] * cosH + qkv[:, 3 * C:4 * C] * sinH
    v = qkv[:, 4 * C:5 * C]

    row = lax.broadcasted_iota(jnp.int32, (T, T), 0)
    col = lax.broadcasted_iota(jnp.int32, (T, T), 1)
    causal = col <= row                  # diagonal always unmasked -> no NaN rows

    head_outs = []
    for h in range(num_heads):           # static unroll; per-head softmax only
        sl = slice(h * hs, (h + 1) * hs)
        s = lax.dot_general(q[:, sl], k[:, sl], (((1,), (1,)), ((), ())),
                            preferred_element_type=jnp.float32)          # (T, T)
        s = jnp.where(causal, s, -jnp.inf)
        m = jnp.max(s, axis=-1, keepdims=True)
        e = jnp.exp(s - m)
        p = e * pl.reciprocal(jnp.sum(e, axis=-1, keepdims=True), approx=True)
        head_outs.append(jnp.dot(p, v[:, sl],
                                 preferred_element_type=jnp.float32))    # (T, hs)
    attn = jnp.concatenate(head_outs, axis=-1)                           # (T, C)
    # Single output projection (concat folded into the weight layout).
    x = x + jnp.dot(attn, wp_ref[0], preferred_element_type=jnp.float32) + bp_ref[0]

    # ---- feed-forward sublayer -----------------------------------------------
    xln2 = _layernorm(x, ln2g_ref[0], ln2b_ref[0])
    hmid = jnp.maximum(
        jnp.dot(xln2, w1_ref[0], preferred_element_type=jnp.float32) + b1_ref[0],
        0.0)
    x = x + jnp.dot(hmid, w2_ref[0], preferred_element_type=jnp.float32) + b2_ref[0]

    out_ref[0] = x


def final_kernel(x_ref, g_ref, b_ref, wf_ref, bf_ref, out_ref):
    """logits tile = LayerNorm(x) @ Wf_tile + bf_tile for one batch element."""
    xln = _layernorm(x_ref[0], g_ref[...], b_ref[...])
    out_ref[0] = jnp.dot(xln, wf_ref[...],
                         preferred_element_type=jnp.float32) + bf_ref[...]


# ----------------------------- wrappers -------------------------------------

def run_transformer_stack(x, st, cosH, sinH, num_heads):
    """All transformer blocks in one pallas_call; grid = (batch, layer)."""
    B, T, C = x.shape
    L, _, C5 = st["wqkv"].shape
    Ch = st["w1"].shape[2]
    xmap = lambda b, l: (b, 0, 0)
    cmap = lambda b, l: (0, 0)           # RoPE tables shared by all layers
    lmap = lambda b, l: (l, 0, 0)        # per-layer weight stacks

    kernel = functools.partial(stack_kernel, num_heads=num_heads)
    return pl.pallas_call(
        kernel,
        out_shape=jax.ShapeDtypeStruct((B, T, C), jnp.float32),
        grid=(B, L),
        in_specs=[
            pl.BlockSpec((1, T, C), xmap),                       # x (embedding)
            pl.BlockSpec((T, C), cmap), pl.BlockSpec((T, C), cmap),   # cos, sin
            pl.BlockSpec((1, 1, C), lmap), pl.BlockSpec((1, 1, C), lmap),  # ln1
            pl.BlockSpec((1, C, C5), lmap),                      # packed qkv
            pl.BlockSpec((1, C, C), lmap),                       # out proj
            pl.BlockSpec((1, 1, C), lmap),                       # proj bias
            pl.BlockSpec((1, 1, C), lmap), pl.BlockSpec((1, 1, C), lmap),  # ln2
            pl.BlockSpec((1, C, Ch), lmap), pl.BlockSpec((1, 1, Ch), lmap),
            pl.BlockSpec((1, Ch, C), lmap), pl.BlockSpec((1, 1, C), lmap),
        ],
        out_specs=pl.BlockSpec((1, T, C), xmap),   # constant over l -> resident
        compiler_params=pltpu.CompilerParams(
            dimension_semantics=("parallel", "arbitrary")),
    )(x, cosH, sinH, st["ln1_g"], st["ln1_b"], st["wqkv"], st["wp"], st["bp"],
      st["ln2_g"], st["ln2_b"], st["w1"], st["b1"], st["w2"], st["b2"])


def run_final(x, params, v_tile=2048):
    """Final LayerNorm + vocab projection, tiled over (batch, vocab)."""
    B, T, C = x.shape
    V = params["wf"].shape[1]
    if V % v_tile != 0 or v_tile % 128 != 0 or v_tile > V:
        v_tile = V          # toy vocab (< 128): single full-width tile
    nvt = V // v_tile
    return pl.pallas_call(
        final_kernel,
        out_shape=jax.ShapeDtypeStruct((B, T, V), jnp.float32),
        grid=(B, nvt),
        in_specs=[
            pl.BlockSpec((1, T, C), lambda b, v: (b, 0, 0)),
            pl.BlockSpec((1, C), lambda b, v: (0, 0)),
            pl.BlockSpec((1, C), lambda b, v: (0, 0)),
            pl.BlockSpec((C, v_tile), lambda b, v: (0, v)),
            pl.BlockSpec((1, v_tile), lambda b, v: (0, v)),
        ],
        out_specs=pl.BlockSpec((1, T, v_tile), lambda b, v: (b, 0, v)),
        compiler_params=pltpu.CompilerParams(
            dimension_semantics=("parallel", "parallel")),
    )(x, params["lnf_g"], params["lnf_b"], params["wf"], params["bf"])


def gpt_forward(tokens, params, cosH, sinH):
    # Token embedding lookup is a gather -> plain JAX glue.
    x = jnp.take(params["emb"], tokens, axis=0)                 # (B, T, C)
    x = run_transformer_stack(x, params["stack"], cosH, sinH, params["H"])
    return run_final(x, params)                                  # (B, T, V)


# ----------------------------- parameter setup ------------------------------

def make_rope_tables(T, hs, base=10000.0):
    half = hs // 2
    theta = 1.0 / (base ** (2.0 * np.arange(half, dtype=np.float32) / hs))
    freqs = np.outer(np.arange(T, dtype=np.float32), theta)     # (T, hs//2)
    cos = np.cos(freqs).astype(np.float32)
    sin = np.sin(freqs).astype(np.float32)
    # pair-repeated tables (T, hs): [c0, c0, c1, c1, ...]
    cosf = np.repeat(cos, 2, axis=-1)
    sinf = np.repeat(sin, 2, axis=-1)
    return jnp.asarray(cos), jnp.asarray(sin), jnp.asarray(cosf), jnp.asarray(sinf)


def make_rotation_matrix(hs):
    # R s.t. (x @ R)[:, 2j] = -x[:, 2j+1] and (x @ R)[:, 2j+1] = x[:, 2j]
    R = np.zeros((hs, hs), dtype=np.float32)
    for j in range(hs // 2):
        R[2 * j + 1, 2 * j] = -1.0
        R[2 * j, 2 * j + 1] = 1.0
    return jnp.asarray(R)


def init_params(key, V, C, H, n_blocks):
    hs = C // H
    R = make_rotation_matrix(hs)

    def normal(k, shape):
        return 0.02 * jax.random.normal(k, shape, dtype=jnp.float32)

    keys = jax.random.split(key, 2 + 6 * n_blocks)
    ki = iter(keys)
    params = {"emb": normal(next(ki), (V, C)), "H": H, "hs": hs,
              "ref_blocks": []}

    stacked = {n: [] for n in ("ln1_g", "ln1_b", "wqkv", "wp", "bp",
                               "ln2_g", "ln2_b", "w1", "b1", "w2", "b2")}
    for _ in range(n_blocks):
        wq = normal(next(ki), (H, hs, C))     # torch Linear weight (out,in)/head
        wk = normal(next(ki), (H, hs, C))
        wv = normal(next(ki), (H, hs, C))

        def to_full(w):                        # (H, hs, C) -> (C, H*hs)
            return jnp.transpose(w, (2, 0, 1)).reshape(C, C)

        def to_rot_full(w):                    # fold RoPE rotation into weight
            wT = jnp.transpose(w, (0, 2, 1))              # (H, C, hs)
            wr = jnp.einsum("hcd,de->hce", wT, R)         # (H, C, hs)
            return jnp.transpose(wr, (1, 0, 2)).reshape(C, C)

        Wq, Wqr = to_full(wq), to_rot_full(wq)
        Wk, Wkr = to_full(wk), to_rot_full(wk)
        Wv = to_full(wv)
        wqkv = jnp.concatenate([Wq, Wqr, Wk, Wkr, Wv], axis=1)   # (C, 5C)

        wproj = normal(next(ki), (C, C))       # torch (out C, in C)
        w1 = normal(next(ki), (4 * C, C))
        w2 = normal(next(ki), (C, 4 * C))

        layer = {
            "ln1_g": jnp.ones((1, C), jnp.float32),
            "ln1_b": jnp.zeros((1, C), jnp.float32),
            "wqkv": wqkv,
            "wp": wproj.T,
            "bp": jnp.zeros((1, C), jnp.float32),
            "ln2_g": jnp.ones((1, C), jnp.float32),
            "ln2_b": jnp.zeros((1, C), jnp.float32),
            "w1": w1.T, "b1": jnp.zeros((1, 4 * C), jnp.float32),
            "w2": w2.T, "b2": jnp.zeros((1, C), jnp.float32),
        }
        for n in stacked:
            stacked[n].append(layer[n])

        # Unfolded weights for the independent pure-JAX reference.
        params["ref_blocks"].append({
            "ln1_g": layer["ln1_g"], "ln1_b": layer["ln1_b"],
            "wq": Wq, "wk": Wk, "wv": Wv,
            "wp": layer["wp"], "bp": layer["bp"],
            "ln2_g": layer["ln2_g"], "ln2_b": layer["ln2_b"],
            "w1": layer["w1"], "b1": layer["b1"],
            "w2": layer["w2"], "b2": layer["b2"],
        })

    params["stack"] = {n: jnp.stack(v, axis=0) for n, v in stacked.items()}

    params["lnf_g"] = jnp.ones((1, C), jnp.float32)
    params["lnf_b"] = jnp.zeros((1, C), jnp.float32)
    wf = normal(next(ki), (V, C))
    params["wf"] = wf.T
    params["bf"] = jnp.zeros((1, V), jnp.float32)
    return params


# ----------------------------- pure-JAX reference ---------------------------

def _rope_ref(x, cos, sin):
    # x: (B, T, H, hs); cos/sin: (T, hs//2)  (true complex rotation)
    B, T, H, D = x.shape
    xr = x.reshape(B, T, H, D // 2, 2)
    re, im = xr[..., 0], xr[..., 1]
    c = cos[None, :, None, :]
    s = sin[None, :, None, :]
    ore = re * c - im * s
    oim = re * s + im * c
    return jnp.stack([ore, oim], axis=-1).reshape(B, T, H, D)


def reference_forward(tokens, params, cos, sin):
    x = jnp.take(params["emb"], tokens, axis=0)
    B, T, C = x.shape
    H, hs = params["H"], params["hs"]
    mask = jnp.tril(jnp.ones((T, T), bool))
    for blk in params["ref_blocks"]:
        xln = _layernorm(x, blk["ln1_g"], blk["ln1_b"])
        q = (xln @ blk["wq"]).reshape(B, T, H, hs)
        k = (xln @ blk["wk"]).reshape(B, T, H, hs)
        v = (xln @ blk["wv"]).reshape(B, T, H, hs)
        q = _rope_ref(q, cos, sin)
        k = _rope_ref(k, cos, sin)
        w = jnp.einsum("bthd,bshd->bhts", q, k) * (hs ** -0.5)
        w = jnp.where(mask, w, -jnp.inf)
        w = jax.nn.softmax(w, axis=-1)
        o = jnp.einsum("bhts,bshd->bthd", w, v).reshape(B, T, C)
        x = x + o @ blk["wp"] + blk["bp"]
        xln2 = _layernorm(x, blk["ln2_g"], blk["ln2_b"])
        hmid = jnp.maximum(xln2 @ blk["w1"] + blk["b1"], 0.0)
        x = x + hmid @ blk["w2"] + blk["b2"]
    xln = _layernorm(x, params["lnf_g"], params["lnf_b"])
    return xln @ params["wf"] + params["bf"]


# ----------------------------- main ------------------------------------------

if __name__ == "__main__":
    # small hyperparameters consistent with the module
    VOCAB = 64
    EMBED = 32
    HEADS = 4
    N_BLOCKS = 2
    B, T = 2, 8
    HEAD_SIZE = EMBED // HEADS

    key = jax.random.PRNGKey(0)
    k_param, k_tok = jax.random.split(key)
    params = init_params(k_param, VOCAB, EMBED, HEADS, N_BLOCKS)
    cos, sin, cosf, sinf = make_rope_tables(T, HEAD_SIZE)
    cosH = jnp.tile(cosf, (1, HEADS))          # (T, C): per-head RoPE tables
    sinH = jnp.tile(sinf, (1, HEADS))

    tokens = jax.random.randint(k_tok, (B, T), 0, VOCAB, dtype=jnp.int32)

    logits = gpt_forward(tokens, params, cosH, sinH)
    logits = jax.block_until_ready(logits)
    assert logits.shape == (B, T, VOCAB), logits.shape

    ref = reference_forward(tokens, params, cos, sin)
    # Tolerance loosened slightly vs 1e-4 because the softmax normalization
    # uses the EUP approximate reciprocal (pl.reciprocal(..., approx=True)).
    np.testing.assert_allclose(np.asarray(logits), np.asarray(ref),
                               atol=1e-3, rtol=1e-3)

    print("KERNEL_OK")
</pallas_src>

<mosaic_0001>
module attributes {stable_mosaic.version = 11 : i64} {
  func.func @stack_kernel(%arg0: i32, %arg1: i32, %arg2: memref<1x8x32xf32, #tpu.memory_space<vmem>>, %arg3: memref<8x32xf32, #tpu.memory_space<vmem>>, %arg4: memref<8x32xf32, #tpu.memory_space<vmem>>, %arg5: memref<1x1x32xf32, #tpu.memory_space<vmem>>, %arg6: memref<1x1x32xf32, #tpu.memory_space<vmem>>, %arg7: memref<1x32x160xf32, #tpu.memory_space<vmem>>, %arg8: memref<1x32x32xf32, #tpu.memory_space<vmem>>, %arg9: memref<1x1x32xf32, #tpu.memory_space<vmem>>, %arg10: memref<1x1x32xf32, #tpu.memory_space<vmem>>, %arg11: memref<1x1x32xf32, #tpu.memory_space<vmem>>, %arg12: memref<1x32x128xf32, #tpu.memory_space<vmem>>, %arg13: memref<1x1x128xf32, #tpu.memory_space<vmem>>, %arg14: memref<1x128x32xf32, #tpu.memory_space<vmem>>, %arg15: memref<1x1x32xf32, #tpu.memory_space<vmem>>, %arg16: memref<1x8x32xf32, #tpu.memory_space<vmem>>) attributes {dimension_semantics = [#tpu.dimension_semantics<parallel>, #tpu.dimension_semantics<arbitrary>], iteration_bounds = array<i64: 2, 2>, scalar_prefetch = 0 : i64, scratch_operands = 0 : i64, tpu.core_type = #tpu.core_type<tc>, window_params = [{transform_indices = @transform_0, window_bounds = array<i64: 1, 8, 32>}, {pipeline_mode = #tpu.pipeline_mode<synchronous>, transform_indices = @transform_1, window_bounds = array<i64: 8, 32>}, {pipeline_mode = #tpu.pipeline_mode<synchronous>, transform_indices = @transform_2, window_bounds = array<i64: 8, 32>}, {transform_indices = @transform_3, window_bounds = array<i64: 1, 1, 32>}, {transform_indices = @transform_4, window_bounds = array<i64: 1, 1, 32>}, {transform_indices = @transform_5, window_bounds = array<i64: 1, 32, 160>}, {transform_indices = @transform_6, window_bounds = array<i64: 1, 32, 32>}, {transform_indices = @transform_7, window_bounds = array<i64: 1, 1, 32>}, {transform_indices = @transform_8, window_bounds = array<i64: 1, 1, 32>}, {transform_indices = @transform_9, window_bounds = array<i64: 1, 1, 32>}, {transform_indices = @transform_10, window_bounds = array<i64: 1, 32, 128>}, {transform_indices = @transform_11, window_bounds = array<i64: 1, 1, 128>}, {transform_indices = @transform_12, window_bounds = array<i64: 1, 128, 32>}, {transform_indices = @transform_13, window_bounds = array<i64: 1, 1, 32>}, {transform_indices = @transform_14, window_bounds = array<i64: 1, 8, 32>}]} {
    %c0_i32 = arith.constant 0 : i32
    %0 = arith.cmpi eq, %arg1, %c0_i32 : i32
    %1 = arith.extui %0 : i1 to i32
    %c0_i32_0 = arith.constant 0 : i32
    %2 = arith.cmpi ne, %1, %c0_i32_0 : i32
    scf.if %2 {
      %c0_78 = arith.constant 0 : index
      %c0_79 = arith.constant 0 : index
      %c0_80 = arith.constant 0 : index
      %175 = vector.load %arg2[%c0_78, %c0_79, %c0_80] : memref<1x8x32xf32, #tpu.memory_space<vmem>>, vector<1x8x32xf32>
      %c0_81 = arith.constant 0 : index
      %c0_82 = arith.constant 0 : index
      %c0_83 = arith.constant 0 : index
      %176 = vector.load %arg16[%c0_81, %c0_82, %c0_83] : memref<1x8x32xf32, #tpu.memory_space<vmem>>, vector<1x8x32xf32>
      tpu.vector_store %arg16[%c0_81, %c0_82, %c0_83], %175 {strides = array<i32>} : memref<1x8x32xf32, #tpu.memory_space<vmem>>, vector<1x8x32xf32>,
    } else {
    }
    %c0 = arith.constant 0 : index
    %c0_1 = arith.constant 0 : index
    %c0_2 = arith.constant 0 : index
    %3 = vector.load %arg16[%c0, %c0_1, %c0_2] : memref<1x8x32xf32, #tpu.memory_space<vmem>>, vector<1x8x32xf32>
    %4 = vector.shape_cast %3 : vector<1x8x32xf32> to vector<8x32xf32>
    %c0_3 = arith.constant 0 : index
    %c0_4 = arith.constant 0 : index
    %c0_5 = arith.constant 0 : index
    %5 = vector.load %arg5[%c0_3, %c0_4, %c0_5] : memref<1x1x32xf32, #tpu.memory_space<vmem>>, vector<1x1x32xf32>
    %6 = vector.shape_cast %5 : vector<1x1x32xf32> to vector<1x32xf32>
    %c0_6 = arith.constant 0 : index
    %c0_7 = arith.constant 0 : index
    %c0_8 = arith.constant 0 : index
    %7 = vector.load %arg6[%c0_6, %c0_7, %c0_8] : memref<1x1x32xf32, #tpu.memory_space<vmem>>, vector<1x1x32xf32>
    %8 = vector.shape_cast %7 : vector<1x1x32xf32> to vector<1x32xf32>
    %cst = arith.constant dense<0.000000e+00> : vector<8xf32>
    %9 = vector.multi_reduction <add>, %4, %cst [1] : vector<8x32xf32> to vector<8xf32>
    %10 = vector.shape_cast %9 : vector<8xf32> to vector<8x1xf32>
    %cst_9 = arith.constant 3.200000e+01 : f32
    %11 = vector.broadcast %cst_9 : f32 to vector<8x1xf32>
    %12 = arith.divf %10, %11 : vector<8x1xf32>
    %13 = vector.broadcast %12 : vector<8x1xf32> to vector<8x32xf32>
    %14 = arith.subf %4, %13 : vector<8x32xf32>
    %15 = arith.mulf %14, %14 : vector<8x32xf32>
    %cst_10 = arith.constant dense<0.000000e+00> : vector<8xf32>
    %16 = vector.multi_reduction <add>, %15, %cst_10 [1] : vector<8x32xf32> to vector<8xf32>
    %17 = vector.shape_cast %16 : vector<8xf32> to vector<8x1xf32>
    %cst_11 = arith.constant 3.200000e+01 : f32
    %18 = vector.broadcast %cst_11 : f32 to vector<8x1xf32>
    %19 = arith.divf %17, %18 : vector<8x1xf32>
    %20 = vector.broadcast %12 : vector<8x1xf32> to vector<8x32xf32>
    %21 = arith.subf %4, %20 : vector<8x32xf32>
    %cst_12 = arith.constant 9.99999974E-6 : f32
    %22 = vector.broadcast %cst_12 : f32 to vector<8x1xf32>
    %23 = arith.addf %19, %22 : vector<8x1xf32>
    %24 = math.rsqrt %23 : vector<8x1xf32>
    %25 = vector.broadcast %24 : vector<8x1xf32> to vector<8x32xf32>
    %26 = arith.mulf %21, %25 : vector<8x32xf32>
    %27 = vector.broadcast %6 : vector<1x32xf32> to vector<8x32xf32>
    %28 = arith.mulf %26, %27 : vector<8x32xf32>
    %29 = vector.broadcast %8 : vector<1x32xf32> to vector<8x32xf32>
    %30 = arith.addf %28, %29 : vector<8x32xf32>
    %c0_13 = arith.constant 0 : index
    %c0_14 = arith.constant 0 : index
    %c0_15 = arith.constant 0 : index
    %31 = vector.load %arg7[%c0_13, %c0_14, %c0_15] : memref<1x32x160xf32, #tpu.memory_space<vmem>>, vector<1x32x160xf32>
    %32 = vector.shape_cast %31 : vector<1x32x160xf32> to vector<32x160xf32>
    %cst_16 = arith.constant dense<0.000000e+00> : vector<8x160xf32>
    %33 = tpu.matmul %30, %32, %cst_16 {dimension_numbers = #tpu.dot_dimension_numbers<[1], [0], [0], [1], [0, 0, 1, 1], [], []>} : vector<8x32xf32>, vector<32x160xf32>, vector<8x160xf32> -> vector<8x160xf32>
    %c0_17 = arith.constant 0 : index
    %c0_18 = arith.constant 0 : index
    %34 = vector.load %arg3[%c0_17, %c0_18] : memref<8x32xf32, #tpu.memory_space<vmem>>, vector<8x32xf32>
    %c0_19 = arith.constant 0 : index
    %c0_20 = arith.constant 0 : index
    %35 = vector.load %arg4[%c0_19, %c0_20] : memref<8x32xf32, #tpu.memory_space<vmem>>, vector<8x32xf32>
    %36 = vector.extract_strided_slice %33 {offsets = [0, 0], sizes = [8, 32], strides = [1, 1]} : vector<8x160xf32> to vector<8x32xf32>
    %37 = arith.mulf %36, %34 : vector<8x32xf32>
    %38 = vector.extract_strided_slice %33 {offsets = [0, 32], sizes = [8, 32], strides = [1, 1]} : vector<8x160xf32> to vector<8x32xf32>
    %39 = arith.mulf %38, %35 : vector<8x32xf32>
    %40 = arith.addf %37, %39 : vector<8x32xf32>
    %cst_21 = arith.constant 0.353553385 : f32
    %41 = vector.broadcast %cst_21 : f32 to vector<8x32xf32>
    %42 = arith.mulf %40, %41 : vector<8x32xf32>
    %43 = vector.extract_strided_slice %33 {offsets = [0, 64], sizes = [8, 32], strides = [1, 1]} : vector<8x160xf32> to vector<8x32xf32>
    %44 = arith.mulf %43, %34 : vector<8x32xf32>
    %45 = vector.extract_strided_slice %33 {offsets = [0, 96], sizes = [8, 32], strides = [1, 1]} : vector<8x160xf32> to vector<8x32xf32>
    %46 = arith.mulf %45, %35 : vector<8x32xf32>
    %47 = arith.addf %44, %46 : vector<8x32xf32>
    %48 = vector.extract_strided_slice %33 {offsets = [0, 128], sizes = [8, 32], strides = [1, 1]} : vector<8x160xf32> to vector<8x32xf32>
    %49 = tpu.iota {dimensions = array<i32: 0>} : vector<8x8xi32>
    %50 = tpu.iota {dimensions = array<i32: 1>} : vector<8x8xi32>
    %51 = arith.cmpi sle, %50, %49 : vector<8x8xi32>
    %52 = vector.extract_strided_slice %42 {offsets = [0, 0], sizes = [8, 8], strides = [1, 1]} : vector<8x32xf32> to vector<8x8xf32>
    %53 = vector.extract_strided_slice %47 {offsets = [0, 0], sizes = [8, 8], strides = [1, 1]} : vector<8x32xf32> to vector<8x8xf32>
    %cst_22 = arith.constant dense<0.000000e+00> : vector<8x8xf32>
    %54 = tpu.matmul %52, %53, %cst_22 {dimension_numbers = #tpu.dot_dimension_numbers<[1], [1], [0], [0], [0, 0, 1, 0], [], []>} : vector<8x8xf32>, vector<8x8xf32>, vector<8x8xf32> -> vector<8x8xf32>
    %cst_23 = arith.constant 0xFF800000 : f32
    %55 = vector.broadcast %cst_23 : f32 to vector<8x8xf32>
    %56 = arith.select %51, %54, %55 : vector<8x8xi1>, vector<8x8xf32>
    %cst_24 = arith.constant dense<0xFF800000> : vector<8xf32>
    %57 = vector.multi_reduction <maximumf>, %56, %cst_24 [1] : vector<8x8xf32> to vector<8xf32>
    %58 = vector.shape_cast %57 : vector<8xf32> to vector<8x1xf32>
    %59 = vector.broadcast %58 : vector<8x1xf32> to vector<8x8xf32>
    %60 = arith.subf %56, %59 : vector<8x8xf32>
    %61 = math.exp %60 : vector<8x8xf32>
    %cst_25 = arith.constant dense<0.000000e+00> : vector<8xf32>
    %62 = vector.multi_reduction <add>, %61, %cst_25 [1] : vector<8x8xf32> to vector<8xf32>
    %63 = vector.shape_cast %62 : vector<8xf32> to vector<8x1xf32>
    %64 = tpu.reciprocal %63 {approx = true} : vector<8x1xf32> -> vector<8x1xf32>
    %65 = vector.broadcast %64 : vector<8x1xf32> to vector<8x8xf32>
    %66 = arith.mulf %61, %65 : vector<8x8xf32>
    %67 = vector.extract_strided_slice %48 {offsets = [0, 0], sizes = [8, 8], strides = [1, 1]} : vector<8x32xf32> to vector<8x8xf32>
    %cst_26 = arith.constant dense<0.000000e+00> : vector<8x8xf32>
    %68 = tpu.matmul %66, %67, %cst_26 {dimension_numbers = #tpu.dot_dimension_numbers<[1], [0], [0], [1], [0, 0, 1, 1], [], []>} : vector<8x8xf32>, vector<8x8xf32>, vector<8x8xf32> -> vector<8x8xf32>
    %69 = vector.extract_strided_slice %42 {offsets = [0, 8], sizes = [8, 8], strides = [1, 1]} : vector<8x32xf32> to vector<8x8xf32>
    %70 = vector.extract_strided_slice %47 {offsets = [0, 8], sizes = [8, 8], strides = [1, 1]} : vector<8x32xf32> to vector<8x8xf32>
    %cst_27 = arith.constant dense<0.000000e+00> : vector<8x8xf32>
    %71 = tpu.matmul %69, %70, %cst_27 {dimension_numbers = #tpu.dot_dimension_numbers<[1], [1], [0], [0], [0, 0, 1, 0], [], []>} : vector<8x8xf32>, vector<8x8xf32>, vector<8x8xf32> -> vector<8x8xf32>
    %cst_28 = arith.constant 0xFF800000 : f32
    %72 = vector.broadcast %cst_28 : f32 to vector<8x8xf32>
    %73 = arith.select %51, %71, %72 : vector<8x8xi1>, vector<8x8xf32>
    %cst_29 = arith.constant dense<0xFF800000> : vector<8xf32>
    %74 = vector.multi_reduction <maximumf>, %73, %cst_29 [1] : vector<8x8xf32> to vector<8xf32>
    %75 = vector.shape_cast %74 : vector<8xf32> to vector<8x1xf32>
    %76 = vector.broadcast %75 : vector<8x1xf32> to vector<8x8xf32>
    %77 = arith.subf %73, %76 : vector<8x8xf32>
    %78 = math.exp %77 : vector<8x8xf32>
    %cst_30 = arith.constant dense<0.000000e+00> : vector<8xf32>
    %79 = vector.multi_reduction <add>, %78, %cst_30 [1] : vector<8x8xf32> to vector<8xf32>
    %80 = vector.shape_cast %79 : vector<8xf32> to vector<8x1xf32>
    %81 = tpu.reciprocal %80 {approx = true} : vector<8x1xf32> -> vector<8x1xf32>
    %82 = vector.broadcast %81 : vector<8x1xf32> to vector<8x8xf32>
    %83 = arith.mulf %78, %82 : vector<8x8xf32>
    %84 = vector.extract_strided_slice %48 {offsets = [0, 8], sizes = [8, 8], strides = [1, 1]} : vector<8x32xf32> to vector<8x8xf32>
    %cst_31 = arith.constant dense<0.000000e+00> : vector<8x8xf32>
    %85 = tpu.matmul %83, %84, %cst_31 {dimension_numbers = #tpu.dot_dimension_numbers<[1], [0], [0], [1], [0, 0, 1, 1], [], []>} : vector<8x8xf32>, vector<8x8xf32>, vector<8x8xf32> -> vector<8x8xf32>
    %86 = vector.extract_strided_slice %42 {offsets = [0, 16], sizes = [8, 8], strides = [1, 1]} : vector<8x32xf32> to vector<8x8xf32>
    %87 = vector.extract_strided_slice %47 {offsets = [0, 16], sizes = [8, 8], strides = [1, 1]} : vector<8x32xf32> to vector<8x8xf32>
    %cst_32 = arith.constant dense<0.000000e+00> : vector<8x8xf32>
    %88 = tpu.matmul %86, %87, %cst_32 {dimension_numbers = #tpu.dot_dimension_numbers<[1], [1], [0], [0], [0, 0, 1, 0], [], []>} : vector<8x8xf32>, vector<8x8xf32>, vector<8x8xf32> -> vector<8x8xf32>
    %cst_33 = arith.constant 0xFF800000 : f32
    %89 = vector.broadcast %cst_33 : f32 to vector<8x8xf32>
    %90 = arith.select %51, %88, %89 : vector<8x8xi1>, vector<8x8xf32>
    %cst_34 = arith.constant dense<0xFF800000> : vector<8xf32>
    %91 = vector.multi_reduction <maximumf>, %90, %cst_34 [1] : vector<8x8xf32> to vector<8xf32>
    %92 = vector.shape_cast %91 : vector<8xf32> to vector<8x1xf32>
    %93 = vector.broadcast %92 : vector<8x1xf32> to vector<8x8xf32>
    %94 = arith.subf %90, %93 : vector<8x8xf32>
    %95 = math.exp %94 : vector<8x8xf32>
    %cst_35 = arith.constant dense<0.000000e+00> : vector<8xf32>
    %96 = vector.multi_reduction <add>, %95, %cst_35 [1] : vector<8x8xf32> to vector<8xf32>
    %97 = vector.shape_cast %96 : vector<8xf32> to vector<8x1xf32>
    %98 = tpu.reciprocal %97 {approx = true} : vector<8x1xf32> -> vector<8x1xf32>
    %99 = vector.broadcast %98 : vector<8x1xf32> to vector<8x8xf32>
    %100 = arith.mulf %95, %99 : vector<8x8xf32>
    %101 = vector.extract_strided_slice %48 {offsets = [0, 16], sizes = [8, 8], strides = [1, 1]} : vector<8x32xf32> to vector<8x8xf32>
    %cst_36 = arith.constant dense<0.000000e+00> : vector<8x8xf32>
    %102 = tpu.matmul %100, %101, %cst_36 {dimension_numbers = #tpu.dot_dimension_numbers<[1], [0], [0], [1], [0, 0, 1, 1], [], []>} : vector<8x8xf32>, vector<8x8xf32>, vector<8x8xf32> -> vector<8x8xf32>
    %103 = vector.extract_strided_slice %42 {offsets = [0, 24], sizes = [8, 8], strides = [1, 1]} : vector<8x32xf32> to vector<8x8xf32>
    %104 = vector.extract_strided_slice %47 {offsets = [0, 24], sizes = [8, 8], strides = [1, 1]} : vector<8x32xf32> to vector<8x8xf32>
    %cst_37 = arith.constant dense<0.000000e+00> : vector<8x8xf32>
    %105 = tpu.matmul %103, %104, %cst_37 {dimension_numbers = #tpu.dot_dimension_numbers<[1], [1], [0], [0], [0, 0, 1, 0], [], []>} : vector<8x8xf32>, vector<8x8xf32>, vector<8x8xf32> -> vector<8x8xf32>
    %cst_38 = arith.constant 0xFF800000 : f32
    %106 = vector.broadcast %cst_38 : f32 to vector<8x8xf32>
    %107 = arith.select %51, %105, %106 : vector<8x8xi1>, vector<8x8xf32>
    %cst_39 = arith.constant dense<0xFF800000> : vector<8xf32>
    %108 = vector.multi_reduction <maximumf>, %107, %cst_39 [1] : vector<8x8xf32> to vector<8xf32>
    %109 = vector.shape_cast %108 : vector<8xf32> to vector<8x1xf32>
    %110 = vector.broadcast %109 : vector<8x1xf32> to vector<8x8xf32>
    %111 = arith.subf %107, %110 : vector<8x8xf32>
    %112 = math.exp %111 : vector<8x8xf32>
    %cst_40 = arith.constant dense<0.000000e+00> : vector<8xf32>
    %113 = vector.multi_reduction <add>, %112, %cst_40 [1] : vector<8x8xf32> to vector<8xf32>
    %114 = vector.shape_cast %113 : vector<8xf32> to vector<8x1xf32>
    %115 = tpu.reciprocal %114 {approx = true} : vector<8x1xf32> -> vector<8x1xf32>
    %116 = vector.broadcast %115 : vector<8x1xf32> to vector<8x8xf32>
    %117 = arith.mulf %112, %116 : vector<8x8xf32>
    %118 = vector.extract_strided_slice %48 {offsets = [0, 24], sizes = [8, 8], strides = [1, 1]} : vector<8x32xf32> to vector<8x8xf32>
    %cst_41 = arith.constant dense<0.000000e+00> : vector<8x8xf32>
    %119 = tpu.matmul %117, %118, %cst_41 {dimension_numbers = #tpu.dot_dimension_numbers<[1], [0], [0], [1], [0, 0, 1, 1], [], []>} : vector<8x8xf32>, vector<8x8xf32>, vector<8x8xf32> -> vector<8x8xf32>
    %120 = tpu.concatenate %68, %85, %102, %119 in 1 : vector<8x8xf32>, vector<8x8xf32>, vector<8x8xf32>, vector<8x8xf32> -> vector<8x32xf32>
    %c0_42 = arith.constant 0 : index
    %c0_43 = arith.constant 0 : index
    %c0_44 = arith.constant 0 : index
    %121 = vector.load %arg8[%c0_42, %c0_43, %c0_44] : memref<1x32x32xf32, #tpu.memory_space<vmem>>, vector<1x32x32xf32>
    %122 = vector.shape_cast %121 : vector<1x32x32xf32> to vector<32x32xf32>
    %cst_45 = arith.constant dense<0.000000e+00> : vector<8x32xf32>
    %123 = tpu.matmul %120, %122, %cst_45 {dimension_numbers = #tpu.dot_dimension_numbers<[1], [0], [0], [1], [0, 0, 1, 1], [], []>} : vector<8x32xf32>, vector<32x32xf32>, vector<8x32xf32> -> vector<8x32xf32>
    %124 = arith.addf %4, %123 : vector<8x32xf32>
    %c0_46 = arith.constant 0 : index
    %c0_47 = arith.constant 0 : index
    %c0_48 = arith.constant 0 : index
    %125 = vector.load %arg9[%c0_46, %c0_47, %c0_48] : memref<1x1x32xf32, #tpu.memory_space<vmem>>, vector<1x1x32xf32>
    %126 = vector.shape_cast %125 : vector<1x1x32xf32> to vector<1x32xf32>
    %127 = vector.broadcast %126 : vector<1x32xf32> to vector<8x32xf32>
    %128 = arith.addf %124, %127 : vector<8x32xf32>
    %c0_49 = arith.constant 0 : index
    %c0_50 = arith.constant 0 : index
    %c0_51 = arith.constant 0 : index
    %129 = vector.load %arg10[%c0_49, %c0_50, %c0_51] : memref<1x1x32xf32, #tpu.memory_space<vmem>>, vector<1x1x32xf32>
    %130 = vector.shape_cast %129 : vector<1x1x32xf32> to vector<1x32xf32>
    %c0_52 = arith.constant 0 : index
    %c0_53 = arith.constant 0 : index
    %c0_54 = arith.constant 0 : index
    %131 = vector.load %arg11[%c0_52, %c0_53, %c0_54] : memref<1x1x32xf32, #tpu.memory_space<vmem>>, vector<1x1x32xf32>
    %132 = vector.shape_cast %131 : vector<1x1x32xf32> to vector<1x32xf32>
    %cst_55 = arith.constant dense<0.000000e+00> : vector<8xf32>
    %133 = vector.multi_reduction <add>, %128, %cst_55 [1] : vector<8x32xf32> to vector<8xf32>
    %134 = vector.shape_cast %133 : vector<8xf32> to vector<8x1xf32>
    %cst_56 = arith.constant 3.200000e+01 : f32
    %135 = vector.broadcast %cst_56 : f32 to vector<8x1xf32>
    %136 = arith.divf %134, %135 : vector<8x1xf32>
    %137 = vector.broadcast %136 : vector<8x1xf32> to vector<8x32xf32>
    %138 = arith.subf %128, %137 : vector<8x32xf32>
    %139 = arith.mulf %138, %138 : vector<8x32xf32>
    %cst_57 = arith.constant dense<0.000000e+00> : vector<8xf32>
    %140 = vector.multi_reduction <add>, %139, %cst_57 [1] : vector<8x32xf32> to vector<8xf32>
    %141 = vector.shape_cast %140 : vector<8xf32> to vector<8x1xf32>
    %cst_58 = arith.constant 3.200000e+01 : f32
    %142 = vector.broadcast %cst_58 : f32 to vector<8x1xf32>
    %143 = arith.divf %141, %142 : vector<8x1xf32>
    %144 = vector.broadcast %136 : vector<8x1xf32> to vector<8x32xf32>
    %145 = arith.subf %128, %144 : vector<8x32xf32>
    %cst_59 = arith.constant 9.99999974E-6 : f32
    %146 = vector.broadcast %cst_59 : f32 to vector<8x1xf32>
    %147 = arith.addf %143, %146 : vector<8x1xf32>
    %148 = math.rsqrt %147 : vector<8x1xf32>
    %149 = vector.broadcast %148 : vector<8x1xf32> to vector<8x32xf32>
    %150 = arith.mulf %145, %149 : vector<8x32xf32>
    %151 = vector.broadcast %130 : vector<1x32xf32> to vector<8x32xf32>
    %152 = arith.mulf %150, %151 : vector<8x32xf32>
    %153 = vector.broadcast %132 : vector<1x32xf32> to vector<8x32xf32>
    %154 = arith.addf %152, %153 : vector<8x32xf32>
    %c0_60 = arith.constant 0 : index
    %c0_61 = arith.constant 0 : index
    %c0_62 = arith.constant 0 : index
    %155 = vector.load %arg12[%c0_60, %c0_61, %c0_62] : memref<1x32x128xf32, #tpu.memory_space<vmem>>, vector<1x32x128xf32>
    %156 = vector.shape_cast %155 : vector<1x32x128xf32> to vector<32x128xf32>
    %cst_63 = arith.constant dense<0.000000e+00> : vector<8x128xf32>
    %157 = tpu.matmul %154, %156, %cst_63 {dimension_numbers = #tpu.dot_dimension_numbers<[1], [0], [0], [1], [0, 0, 1, 1], [], []>} : vector<8x32xf32>, vector<32x128xf32>, vector<8x128xf32> -> vector<8x128xf32>
    %c0_64 = arith.constant 0 : index
    %c0_65 = arith.constant 0 : index
    %c0_66 = arith.constant 0 : index
    %158 = vector.load %arg13[%c0_64, %c0_65, %c0_66] : memref<1x1x128xf32, #tpu.memory_space<vmem>>, vector<1x1x128xf32>
    %159 = vector.shape_cast %158 : vector<1x1x128xf32> to vector<1x128xf32>
    %160 = vector.broadcast %159 : vector<1x128xf32> to vector<8x128xf32>
    %161 = arith.addf %157, %160 : vector<8x128xf32>
    %cst_67 = arith.constant 0.000000e+00 : f32
    %162 = vector.broadcast %cst_67 : f32 to vector<8x128xf32>
    %163 = arith.maximumf %161, %162 : vector<8x128xf32>
    %c0_68 = arith.constant 0 : index
    %c0_69 = arith.constant 0 : index
    %c0_70 = arith.constant 0 : index
    %164 = vector.load %arg14[%c0_68, %c0_69, %c0_70] : memref<1x128x32xf32, #tpu.memory_space<vmem>>, vector<1x128x32xf32>
    %165 = vector.shape_cast %164 : vector<1x128x32xf32> to vector<128x32xf32>
    %cst_71 = arith.constant dense<0.000000e+00> : vector<8x32xf32>
    %166 = tpu.matmul %163, %165, %cst_71 {dimension_numbers = #tpu.dot_dimension_numbers<[1], [0], [0], [1], [0, 0, 1, 1], [], []>} : vector<8x128xf32>, vector<128x32xf32>, vector<8x32xf32> -> vector<8x32xf32>
    %167 = arith.addf %128, %166 : vector<8x32xf32>
    %c0_72 = arith.constant 0 : index
    %c0_73 = arith.constant 0 : index
    %c0_74 = arith.constant 0 : index
    %168 = vector.load %arg15[%c0_72, %c0_73, %c0_74] : memref<1x1x32xf32, #tpu.memory_space<vmem>>, vector<1x1x32xf32>
    %169 = vector.shape_cast %168 : vector<1x1x32xf32> to vector<1x32xf32>
    %170 = vector.broadcast %169 : vector<1x32xf32> to vector<8x32xf32>
    %171 = arith.addf %167, %170 : vector<8x32xf32>
    %c0_75 = arith.constant 0 : index
    %c0_76 = arith.constant 0 : index
    %c0_77 = arith.constant 0 : index
    %172 = vector.load %arg16[%c0_75, %c0_76, %c0_77] : memref<1x8x32xf32, #tpu.memory_space<vmem>>, vector<1x8x32xf32>
    %173 = vector.shape_cast %172 : vector<1x8x32xf32> to vector<8x32xf32>
    %174 = vector.shape_cast %171 : vector<8x32xf32> to vector<1x8x32xf32>
    tpu.vector_store %arg16[%c0_75, %c0_76, %c0_77], %174 {strides = array<i32>} : memref<1x8x32xf32, #tpu.memory_space<vmem>>, vector<1x8x32xf32>,
    return
  }
  func.func @transform_0(%arg0: i32, %arg1: i32) -> (i32, i32, i32) {
    %c0_i32 = arith.constant 0 : i32
    %c0_i32_0 = arith.constant 0 : i32
    %c0_i32_1 = arith.constant 0 : i32
    return %arg0, %c0_i32, %c0_i32_0 : i32, i32, i32
  }
  func.func @transform_1(%arg0: i32, %arg1: i32) -> (i32, i32) {
    %c0_i32 = arith.constant 0 : i32
    %c0_i32_0 = arith.constant 0 : i32
    %c0_i32_1 = arith.constant 0 : i32
    return %c0_i32, %c0_i32_0 : i32, i32
  }
  func.func @transform_2(%arg0: i32, %arg1: i32) -> (i32, i32) {
    %c0_i32 = arith.constant 0 : i32
    %c0_i32_0 = arith.constant 0 : i32
    %c0_i32_1 = arith.constant 0 : i32
    return %c0_i32, %c0_i32_0 : i32, i32
  }
  func.func @transform_3(%arg0: i32, %arg1: i32) -> (i32, i32, i32) {
    %c0_i32 = arith.constant 0 : i32
    %c0_i32_0 = arith.constant 0 : i32
    %c0_i32_1 = arith.constant 0 : i32
    return %arg1, %c0_i32, %c0_i32_0 : i32, i32, i32
  }
  func.func @transform_4(%arg0: i32, %arg1: i32) -> (i32, i32, i32) {
    %c0_i32 = arith.constant 0 : i32
    %c0_i32_0 = arith.constant 0 : i32
    %c0_i32_1 = arith.constant 0 : i32
    return %arg1, %c0_i32, %c0_i32_0 : i32, i32, i32
  }
  func.func @transform_5(%arg0: i32, %arg1: i32) -> (i32, i32, i32) {
    %c0_i32 = arith.constant 0 : i32
    %c0_i32_0 = arith.constant 0 : i32
    %c0_i32_1 = arith.constant 0 : i32
    return %arg1, %c0_i32, %c0_i32_0 : i32, i32, i32
  }
  func.func @transform_6(%arg0: i32, %arg1: i32) -> (i32, i32, i32) {
    %c0_i32 = arith.constant 0 : i32
    %c0_i32_0 = arith.constant 0 : i32
    %c0_i32_1 = arith.constant 0 : i32
    return %arg1, %c0_i32, %c0_i32_0 : i32, i32, i32
  }
  func.func @transform_7(%arg0: i32, %arg1: i32) -> (i32, i32, i32) {
    %c0_i32 = arith.constant 0 : i32
    %c0_i32_0 = arith.constant 0 : i32
    %c0_i32_1 = arith.constant 0 : i32
    return %arg1, %c0_i32, %c0_i32_0 : i32, i32, i32
  }
  func.func @transform_8(%arg0: i32, %arg1: i32) -> (i32, i32, i32) {
    %c0_i32 = arith.constant 0 : i32
    %c0_i32_0 = arith.constant 0 : i32
    %c0_i32_1 = arith.constant 0 : i32
    return %arg1, %c0_i32, %c0_i32_0 : i32, i32, i32
  }
  func.func @transform_9(%arg0: i32, %arg1: i32) -> (i32, i32, i32) {
    %c0_i32 = arith.constant 0 : i32
    %c0_i32_0 = arith.constant 0 : i32
    %c0_i32_1 = arith.constant 0 : i32
    return %arg1, %c0_i32, %c0_i32_0 : i32, i32, i32
  }
  func.func @transform_10(%arg0: i32, %arg1: i32) -> (i32, i32, i32) {
    %c0_i32 = arith.constant 0 : i32
    %c0_i32_0 = arith.constant 0 : i32
    %c0_i32_1 = arith.constant 0 : i32
    return %arg1, %c0_i32, %c0_i32_0 : i32, i32, i32
  }
  func.func @transform_11(%arg0: i32, %arg1: i32) -> (i32, i32, i32) {
    %c0_i32 = arith.constant 0 : i32
    %c0_i32_0 = arith.constant 0 : i32
    %c0_i32_1 = arith.constant 0 : i32
    return %arg1, %c0_i32, %c0_i32_0 : i32, i32, i32
  }
  func.func @transform_12(%arg0: i32, %arg1: i32) -> (i32, i32, i32) {
    %c0_i32 = arith.constant 0 : i32
    %c0_i32_0 = arith.constant 0 : i32
    %c0_i32_1 = arith.constant 0 : i32
    return %arg1, %c0_i32, %c0_i32_0 : i32, i32, i32
  }
  func.func @transform_13(%arg0: i32, %arg1: i32) -> (i32, i32, i32) {
    %c0_i32 = arith.constant 0 : i32
    %c0_i32_0 = arith.constant 0 : i32
    %c0_i32_1 = arith.constant 0 : i32
    return %arg1, %c0_i32, %c0_i32_0 : i32, i32, i32
  }
  func.func @transform_14(%arg0: i32, %arg1: i32) -> (i32, i32, i32) {
    %c0_i32 = arith.constant 0 : i32
    %c0_i32_0 = arith.constant 0 : i32
    %c0_i32_1 = arith.constant 0 : i32
    return %arg0, %c0_i32, %c0_i32_0 : i32, i32, i32
  }
}

</mosaic_0001>

<llo_original>
// kernel: tpu_custom_call.1
$region0: #{tpu_custom_call.1}
  #allocation0 [shape = 'u32[]', space=smem, size = 0x4, offset = 0x4, fixed_abs, tag = 'smem constant byte address 0x4 - core index']
  #allocation1 [shape = 'u32[144,128]{1,0:T(1,128)}', space=vmem, size = 0x12000, scoped, tag = 'internal scratch']
  %s0 = inlined_call_operand.vmem [shape: f32[2,8,32], index: 0, kind: input, shape index: {}]
  %s1 = inlined_call_operand.vmem [shape: f32[8,32], index: 1, kind: input, shape index: {}]
  %s2 = inlined_call_operand.vmem [shape: f32[8,32], index: 2, kind: input, shape index: {}]
  %s3 = inlined_call_operand.vmem [shape: f32[2,1,32], index: 3, kind: input, shape index: {}]
  %s4 = inlined_call_operand.vmem [shape: f32[2,1,32], index: 4, kind: input, shape index: {}]
  %s5 = inlined_call_operand.vmem [shape: f32[2,32,160], index: 5, kind: input, shape index: {}]
  %s6 = inlined_call_operand.vmem [shape: f32[2,32,32], index: 6, kind: input, shape index: {}]
  %s7 = inlined_call_operand.vmem [shape: f32[2,1,32], index: 7, kind: input, shape index: {}]
  %s8 = inlined_call_operand.vmem [shape: f32[2,1,32], index: 8, kind: input, shape index: {}]
  %s9 = inlined_call_operand.vmem [shape: f32[2,1,32], index: 9, kind: input, shape index: {}]
  %s10 = inlined_call_operand.vmem [shape: f32[2,32,128], index: 10, kind: input, shape index: {}]
  %s11 = inlined_call_operand.vmem [shape: f32[2,1,128], index: 11, kind: input, shape index: {}]
  %s12 = inlined_call_operand.vmem [shape: f32[2,128,32], index: 12, kind: input, shape index: {}]
  %s13 = inlined_call_operand.vmem [shape: f32[2,1,32], index: 13, kind: input, shape index: {}]
  %s14 = inlined_call_operand.hbm [shape: f32[2,8,32], index: 14, kind: output, shape index: {}]
  %s15 = sld [smem:[#allocation0]]
  $region93: #{tpu_custom_call.1} parent=0
    _
  %s17 = ssub.s32 1, %s15
  %s18 = scalar_select 0, %s17, %s15
  $region1: #{tpu_custom_call.1} parent=0
    #allocation2 [shape = 'u8[8192]{0}', space=vmem, size = 0x2000, scoped, tag = 'output window, operand 0']
    #allocation3 [shape = 's32[2]{0}', space=sflag, size = 0x8, scoped, tag = 'scoped memory for tpu_custom_call.1']
    %19 = vsyncpa [#allocation3], 0
    %s20 = scalar_lea.sflag [#allocation3], 1
    %21 = vsyncpa %s20, 0
    loop: start=0, step=1, limit=6
    $region2: #{tpu_custom_call.1} parent=1 // loop_pre_header
      _
    $region3: #{tpu_custom_call.1} parent=1 // loop_header
      %s23 = sphi 0, %s27
      %p24 = scmp.ge.s32.totalorder %s23, 6
      %s30 = sphi 0, %s42
      %s31 = sphi 0, %s38
      %s32 = sphi 0, %s30
      %s33 = sphi 0, %s31
      %s34 = sphi 0, %s32
      %s35 = sphi 0, %s33
      %s45 = sphi 0, %s47
      %s48 = sphi 0, %s45
      %s49 = sphi 0, %s48
      %s65 = sphi 0, %s49
      %s69 = sphi 0, %s69
      %s71 = sphi 0, %s69
      %s72 = sphi 0, %s71
      %s86 = sphi 0, %s72
      %s90 = sphi 0, %s90
      %s92 = sphi 0, %s90
      %s93 = sphi 0, %s92
      %s107 = sphi 0, %s93
      %s113 = sphi 0, %s115
      %s116 = sphi 0, %s113
      %s117 = sphi 0, %s116
      %s133 = sphi 0, %s117
      %s139 = sphi 0, %s141
      %s142 = sphi 0, %s139
      %s143 = sphi 0, %s142
      %s159 = sphi 0, %s143
      %s165 = sphi 0, %s167
      %s168 = sphi 0, %s165
      %s169 = sphi 0, %s168
      %s185 = sphi 0, %s169
      %s191 = sphi 0, %s193
      %s194 = sphi 0, %s191
      %s195 = sphi 0, %s194
      %s211 = sphi 0, %s195
      %s217 = sphi 0, %s219
      %s220 = sphi 0, %s217
      %s221 = sphi 0, %s220
      %s237 = sphi 0, %s221
      %s243 = sphi 0, %s245
      %s246 = sphi 0, %s243
      %s247 = sphi 0, %s246
      %s263 = sphi 0, %s247
      %s269 = sphi 0, %s271
      %s272 = sphi 0, %s269
      %s273 = sphi 0, %s272
      %s289 = sphi 0, %s273
      %s295 = sphi 0, %s297
      %s298 = sphi 0, %s295
      %s299 = sphi 0, %s298
      %s315 = sphi 0, %s299
      %s321 = sphi 0, %s323
      %s324 = sphi 0, %s321
      %s325 = sphi 0, %s324
      %s341 = sphi 0, %s325
      %s347 = sphi 0, %s349
      %s350 = sphi 0, %s347
      %s351 = sphi 0, %s350
      %s367 = sphi 0, %s351
      %s373 = sphi 0, %s375
      %s376 = sphi 0, %s373
      %s377 = sphi 0, %s376
      %s393 = sphi 0, %s377
      %s399 = sphi 0, %s401
      %s402 = sphi 0, %s399
      %s403 = sphi 0, %s402
      %s419 = sphi 0, %s403
    $region4: #{tpu_custom_call.1} parent=1 // loop_header_branch
      %26 = sbr.rel (%p24) target = $region8
    $region5: #{tpu_custom_call.1} parent=1 // loop_body
      %s28 = ssub.s32 %s23, 1
      %s29 = ssub.s32 %s23, 2
      %s36 = sadd.s32 1, %s31
      %p37 = scmp.ge.s32.totalorder %s36, 2
      %s38 = scalar_select %p37, 0, %s36
      %s39 = sadd.s32 1, %s30
      %s40 = scalar_select %p37, %s39, %s30
      %p41 = scmp.ge.s32.totalorder %s40, 2
      %s42 = scalar_select %p41, 0, %s40
      %s43 = ssub.s32 %s30, %s42
      %p44 = scmp.eq.s32.totalorder %s43, 0
      %s46 = sadd.s32 %s45, 1
      %s47 = scalar_select %p44, %s45, %s46
      %p50 = pneg %p44
      %p51 = scmp.eq.s32.totalorder %s23, 3
      %p52 = por %p50, %p51
      %p53 = scmp.ne.s32.totalorder %s45, %s48
      %p54 = scmp.eq.s32.totalorder %s23, 0
      %p55 = por %p53, %p54
      %p56 = scmp.ne.s32.totalorder %s45, %s48
      %p57 = scmp.eq.s32.totalorder %s28, 3
      %p58 = por %p56, %p57
      %p59 = scmp.ne.s32.totalorder %s48, %s49
      %p60 = scmp.eq.s32.totalorder %s28, 0
      %p61 = por %p59, %p60
      %p62 = scmp.ne.s32.totalorder %s48, %s49
      %p63 = scmp.eq.s32.totalorder %s29, 3
      %p64 = por %p62, %p63
      %p66 = scmp.ne.s32.totalorder %s49, %s65
      %p67 = scmp.eq.s32.totalorder %s29, 0
      %p68 = por %p66, %p67
      %s70 = sadd.s32 %s69, 1
      %p73 = scmp.eq.s32.totalorder %s23, 3
      %p74 = scmp.ne.s32.totalorder %s69, %s71
      %p75 = scmp.eq.s32.totalorder %s23, 0
      %p76 = por %p74, %p75
      %p77 = scmp.ne.s32.totalorder %s69, %s71
      %p78 = scmp.eq.s32.totalorder %s28, 3
      %p79 = por %p77, %p78
      %p80 = scmp.ne.s32.totalorder %s71, %s72
      %p81 = scmp.eq.s32.totalorder %s28, 0
      %p82 = por %p80, %p81
      %p83 = scmp.ne.s32.totalorder %s71, %s72
      %p84 = scmp.eq.s32.totalorder %s29, 3
      %p85 = por %p83, %p84
      %p87 = scmp.ne.s32.totalorder %s72, %s86
      %p88 = scmp.eq.s32.totalorder %s29, 0
      %p89 = por %p87, %p88
      %s91 = sadd.s32 %s90, 1
      %p94 = scmp.eq.s32.totalorder %s23, 3
      %p95 = scmp.ne.s32.totalorder %s90, %s92
      %p96 = scmp.eq.s32.totalorder %s23, 0
      %p97 = por %p95, %p96
      %p98 = scmp.ne.s32.totalorder %s90, %s92
      %p99 = scmp.eq.s32.totalorder %s28, 3
      %p100 = por %p98, %p99
      %p101 = scmp.ne.s32.totalorder %s92, %s93
      %p102 = scmp.eq.s32.totalorder %s28, 0
      %p103 = por %p101, %p102
      %p104 = scmp.ne.s32.totalorder %s92, %s93
      %p105 = scmp.eq.s32.totalorder %s29, 3
      %p106 = por %p104, %p105
      %p108 = scmp.ne.s32.totalorder %s93, %s107
      %p109 = scmp.eq.s32.totalorder %s29, 0
      %p110 = por %p108, %p109
      %s111 = ssub.s32 %s31, %s38
      %p112 = scmp.eq.s32.totalorder %s111, 0
      %s114 = sadd.s32 %s113, 1
      %s115 = scalar_select %p112, %s113, %s114
      %p118 = pneg %p112
      %p119 = scmp.eq.s32.totalorder %s23, 3
      %p120 = por %p118, %p119
      %p121 = scmp.ne.s32.totalorder %s113, %s116
      %p122 = scmp.eq.s32.totalorder %s23, 0
      %p123 = por %p121, %p122
      %p124 = scmp.ne.s32.totalorder %s113, %s116
      %p125 = scmp.eq.s32.totalorder %s28, 3
      %p126 = por %p124, %p125
      %p127 = scmp.ne.s32.totalorder %s116, %s117
      %p128 = scmp.eq.s32.totalorder %s28, 0
      %p129 = por %p127, %p128
      %p130 = scmp.ne.s32.totalorder %s116, %s117
      %p131 = scmp.eq.s32.totalorder %s29, 3
      %p132 = por %p130, %p131
      %p134 = scmp.ne.s32.totalorder %s117, %s133
      %p135 = scmp.eq.s32.totalorder %s29, 0
      %p136 = por %p134, %p135
      %s137 = ssub.s32 %s31, %s38
      %p138 = scmp.eq.s32.totalorder %s137, 0
      %s140 = sadd.s32 %s139, 1
      %s141 = scalar_select %p138, %s139, %s140
      %p144 = pneg %p138
      %p145 = scmp.eq.s32.totalorder %s23, 3
      %p146 = por %p144, %p145
      %p147 = scmp.ne.s32.totalorder %s139, %s142
      %p148 = scmp.eq.s32.totalorder %s23, 0
      %p149 = por %p147, %p148
      %p150 = scmp.ne.s32.totalorder %s139, %s142
      %p151 = scmp.eq.s32.totalorder %s28, 3
      %p152 = por %p150, %p151
      %p153 = scmp.ne.s32.totalorder %s142, %s143
      %p154 = scmp.eq.s32.totalorder %s28, 0
      %p155 = por %p153, %p154
      %p156 = scmp.ne.s32.totalorder %s142, %s143
      %p157 = scmp.eq.s32.totalorder %s29, 3
      %p158 = por %p156, %p157
      %p160 = scmp.ne.s32.totalorder %s143, %s159
      %p161 = scmp.eq.s32.totalorder %s29, 0
      %p162 = por %p160, %p161
      %s163 = ssub.s32 %s31, %s38
      %p164 = scmp.eq.s32.totalorder %s163, 0
      %s166 = sadd.s32 %s165, 1
      %s167 = scalar_select %p164, %s165, %s166
      %p170 = pneg %p164
      %p171 = scmp.eq.s32.totalorder %s23, 3
      %p172 = por %p170, %p171
      %p173 = scmp.ne.s32.totalorder %s165, %s168
      %p174 = scmp.eq.s32.totalorder %s23, 0
      %p175 = por %p173, %p174
      %p176 = scmp.ne.s32.totalorder %s165, %s168
      %p177 = scmp.eq.s32.totalorder %s28, 3
      %p178 = por %p176, %p177
      %p179 = scmp.ne.s32.totalorder %s168, %s169
      %p180 = scmp.eq.s32.totalorder %s28, 0
      %p181 = por %p179, %p180
      %p182 = scmp.ne.s32.totalorder %s168, %s169
      %p183 = scmp.eq.s32.totalorder %s29, 3
      %p184 = por %p182, %p183
      %p186 = scmp.ne.s32.totalorder %s169, %s185
      %p187 = scmp.eq.s32.totalorder %s29, 0
      %p188 = por %p186, %p187
      %s189 = ssub.s32 %s31, %s38
      %p190 = scmp.eq.s32.totalorder %s189, 0
      %s192 = sadd.s32 %s191, 1
      %s193 = scalar_select %p190, %s191, %s192
      %p196 = pneg %p190
      %p197 = scmp.eq.s32.totalorder %s23, 3
      %p198 = por %p196, %p197
      %p199 = scmp.ne.s32.totalorder %s191, %s194
      %p200 = scmp.eq.s32.totalorder %s23, 0
      %p201 = por %p199, %p200
      %p202 = scmp.ne.s32.totalorder %s191, %s194
      %p203 = scmp.eq.s32.totalorder %s28, 3
      %p204 = por %p202, %p203
      %p205 = scmp.ne.s32.totalorder %s194, %s195
      %p206 = scmp.eq.s32.totalorder %s28, 0
      %p207 = por %p205, %p206
      %p208 = scmp.ne.s32.totalorder %s194, %s195
      %p209 = scmp.eq.s32.totalorder %s29, 3
      %p210 = por %p208, %p209
      %p212 = scmp.ne.s32.totalorder %s195, %s211
      %p213 = scmp.eq.s32.totalorder %s29, 0
      %p214 = por %p212, %p213
      %s215 = ssub.s32 %s31, %s38
      %p216 = scmp.eq.s32.totalorder %s215, 0
      %s218 = sadd.s32 %s217, 1
      %s219 = scalar_select %p216, %s217, %s218
      %p222 = pneg %p216
      %p223 = scmp.eq.s32.totalorder %s23, 3
      %p224 = por %p222, %p223
      %p225 = scmp.ne.s32.totalorder %s217, %s220
      %p226 = scmp.eq.s32.totalorder %s23, 0
      %p227 = por %p225, %p226
      %p228 = scmp.ne.s32.totalorder %s217, %s220
      %p229 = scmp.eq.s32.totalorder %s28, 3
      %p230 = por %p228, %p229
      %p231 = scmp.ne.s32.totalorder %s220, %s221
      %p232 = scmp.eq.s32.totalorder %s28, 0
      %p233 = por %p231, %p232
      %p234 = scmp.ne.s32.totalorder %s220, %s221
      %p235 = scmp.eq.s32.totalorder %s29, 3
      %p236 = por %p234, %p235
      %p238 = scmp.ne.s32.totalorder %s221, %s237
      %p239 = scmp.eq.s32.totalorder %s29, 0
      %p240 = por %p238, %p239
      %s241 = ssub.s32 %s31, %s38
      %p242 = scmp.eq.s32.totalorder %s241, 0
      %s244 = sadd.s32 %s243, 1
      %s245 = scalar_select %p242, %s243, %s244
      %p248 = pneg %p242
      %p249 = scmp.eq.s32.totalorder %s23, 3
      %p250 = por %p248, %p249
      %p251 = scmp.ne.s32.totalorder %s243, %s246
      %p252 = scmp.eq.s32.totalorder %s23, 0
      %p253 = por %p251, %p252
      %p254 = scmp.ne.s32.totalorder %s243, %s246
      %p255 = scmp.eq.s32.totalorder %s28, 3
      %p256 = por %p254, %p255
      %p257 = scmp.ne.s32.totalorder %s246, %s247
      %p258 = scmp.eq.s32.totalorder %s28, 0
      %p259 = por %p257, %p258
      %p260 = scmp.ne.s32.totalorder %s246, %s247
      %p261 = scmp.eq.s32.totalorder %s29, 3
      %p262 = por %p260, %p261
      %p264 = scmp.ne.s32.totalorder %s247, %s263
      %p265 = scmp.eq.s32.totalorder %s29, 0
      %p266 = por %p264, %p265
      %s267 = ssub.s32 %s31, %s38
      %p268 = scmp.eq.s32.totalorder %s267, 0
      %s270 = sadd.s32 %s269, 1
      %s271 = scalar_select %p268, %s269, %s270
      %p274 = pneg %p268
      %p275 = scmp.eq.s32.totalorder %s23, 3
      %p276 = por %p274, %p275
      %p277 = scmp.ne.s32.totalorder %s269, %s272
      %p278 = scmp.eq.s32.totalorder %s23, 0
      %p279 = por %p277, %p278
      %p280 = scmp.ne.s32.totalorder %s269, %s272
      %p281 = scmp.eq.s32.totalorder %s28, 3
      %p282 = por %p280, %p281
      %p283 = scmp.ne.s32.totalorder %s272, %s273
      %p284 = scmp.eq.s32.totalorder %s28, 0
      %p285 = por %p283, %p284
      %p286 = scmp.ne.s32.totalorder %s272, %s273
      %p287 = scmp.eq.s32.totalorder %s29, 3
      %p288 = por %p286, %p287
      %p290 = scmp.ne.s32.totalorder %s273, %s289
      %p291 = scmp.eq.s32.totalorder %s29, 0
      %p292 = por %p290, %p291
      %s293 = ssub.s32 %s31, %s38
      %p294 = scmp.eq.s32.totalorder %s293, 0
      %s296 = sadd.s32 %s295, 1
      %s297 = scalar_select %p294, %s295, %s296
      %p300 = pneg %p294
      %p301 = scmp.eq.s32.totalorder %s23, 3
      %p302 = por %p300, %p301
      %p303 = scmp.ne.s32.totalorder %s295, %s298
      %p304 = scmp.eq.s32.totalorder %s23, 0
      %p305 = por %p303, %p304
      %p306 = scmp.ne.s32.totalorder %s295, %s298
      %p307 = scmp.eq.s32.totalorder %s28, 3
      %p308 = por %p306, %p307
      %p309 = scmp.ne.s32.totalorder %s298, %s299
      %p310 = scmp.eq.s32.totalorder %s28, 0
      %p311 = por %p309, %p310
      %p312 = scmp.ne.s32.totalorder %s298, %s299
      %p313 = scmp.eq.s32.totalorder %s29, 3
      %p314 = por %p312, %p313
      %p316 = scmp.ne.s32.totalorder %s299, %s315
      %p317 = scmp.eq.s32.totalorder %s29, 0
      %p318 = por %p316, %p317
      %s319 = ssub.s32 %s31, %s38
      %p320 = scmp.eq.s32.totalorder %s319, 0
      %s322 = sadd.s32 %s321, 1
      %s323 = scalar_select %p320, %s321, %s322
      %p326 = pneg %p320
      %p327 = scmp.eq.s32.totalorder %s23, 3
      %p328 = por %p326, %p327
      %p329 = scmp.ne.s32.totalorder %s321, %s324
      %p330 = scmp.eq.s32.totalorder %s23, 0
      %p331 = por %p329, %p330
      %p332 = scmp.ne.s32.totalorder %s321, %s324
      %p333 = scmp.eq.s32.totalorder %s28, 3
      %p334 = por %p332, %p333
      %p335 = scmp.ne.s32.totalorder %s324, %s325
      %p336 = scmp.eq.s32.totalorder %s28, 0
      %p337 = por %p335, %p336
      %p338 = scmp.ne.s32.totalorder %s324, %s325
      %p339 = scmp.eq.s32.totalorder %s29, 3
      %p340 = por %p338, %p339
      %p342 = scmp.ne.s32.totalorder %s325, %s341
      %p343 = scmp.eq.s32.totalorder %s29, 0
      %p344 = por %p342, %p343
      %s345 = ssub.s32 %s31, %s38
      %p346 = scmp.eq.s32.totalorder %s345, 0
      %s348 = sadd.s32 %s347, 1
      %s349 = scalar_select %p346, %s347, %s348
      %p352 = pneg %p346
      %p353 = scmp.eq.s32.totalorder %s23, 3
      %p354 = por %p352, %p353
      %p355 = scmp.ne.s32.totalorder %s347, %s350
      %p356 = scmp.eq.s32.totalorder %s23, 0
      %p357 = por %p355, %p356
      %p358 = scmp.ne.s32.totalorder %s347, %s350
      %p359 = scmp.eq.s32.totalorder %s28, 3
      %p360 = por %p358, %p359
      %p361 = scmp.ne.s32.totalorder %s350, %s351
      %p362 = scmp.eq.s32.totalorder %s28, 0
      %p363 = por %p361, %p362
      %p364 = scmp.ne.s32.totalorder %s350, %s351
      %p365 = scmp.eq.s32.totalorder %s29, 3
      %p366 = por %p364, %p365
      %p368 = scmp.ne.s32.totalorder %s351, %s367
      %p369 = scmp.eq.s32.totalorder %s29, 0
      %p370 = por %p368, %p369
      %s371 = ssub.s32 %s31, %s38
      %p372 = scmp.eq.s32.totalorder %s371, 0
      %s374 = sadd.s32 %s373, 1
      %s375 = scalar_select %p372, %s373, %s374
      %p378 = pneg %p372
      %p379 = scmp.eq.s32.totalorder %s23, 3
      %p380 = por %p378, %p379
      %p381 = scmp.ne.s32.totalorder %s373, %s376
      %p382 = scmp.eq.s32.totalorder %s23, 0
      %p383 = por %p381, %p382
      %p384 = scmp.ne.s32.totalorder %s373, %s376
      %p385 = scmp.eq.s32.totalorder %s28, 3
      %p386 = por %p384, %p385
      %p387 = scmp.ne.s32.totalorder %s376, %s377
      %p388 = scmp.eq.s32.totalorder %s28, 0
      %p389 = por %p387, %p388
      %p390 = scmp.ne.s32.totalorder %s376, %s377
      %p391 = scmp.eq.s32.totalorder %s29, 3
      %p392 = por %p390, %p391
      %p394 = scmp.ne.s32.totalorder %s377, %s393
      %p395 = scmp.eq.s32.totalorder %s29, 0
      %p396 = por %p394, %p395
      %s397 = ssub.s32 %s30, %s42
      %p398 = scmp.eq.s32.totalorder %s397, 0
      %s400 = sadd.s32 %s399, 1
      %s401 = scalar_select %p398, %s399, %s400
      %p404 = pneg %p398
      %p405 = scmp.eq.s32.totalorder %s23, 3
      %p406 = por %p404, %p405
      %p407 = scmp.ne.s32.totalorder %s399, %s402
      %p408 = scmp.eq.s32.totalorder %s23, 0
      %p409 = por %p407, %p408
      %p410 = scmp.ne.s32.totalorder %s399, %s402
      %p411 = scmp.eq.s32.totalorder %s28, 3
      %p412 = por %p410, %p411
      %p413 = scmp.ne.s32.totalorder %s402, %s403
      %p414 = scmp.eq.s32.totalorder %s28, 0
      %p415 = por %p413, %p414
      %p416 = scmp.ne.s32.totalorder %s402, %s403
      %p417 = scmp.eq.s32.totalorder %s29, 3
      %p418 = por %p416, %p417
      %p420 = scmp.ne.s32.totalorder %s403, %s419
      %p421 = scmp.eq.s32.totalorder %s29, 0
      %p422 = por %p420, %p421
      %p423 = scmp.le.s32.totalorder 1, %s23
      %p424 = scmp.lt.s32.totalorder %s23, 5
      %p425 = pnand %p423, %p424
      %p426 = pneg %p425
      // Predicated region
      $region9: #{tpu_custom_call.1} parent=5 // pred_check
        _
      $region10: #{tpu_custom_call.1} parent=5 // pred_check_branch
        %428 = sbr.rel (%p425) target = $region12
      $region11: #{tpu_custom_call.1} parent=5 // pred_region
        %s429 = ssub.s32 %s23, 1
        // Predicated region
        $region13: #{tpu_custom_call.1} parent=11 // pred_check
          %p430 = pneg %p82
        $region14: #{tpu_custom_call.1} parent=11 // pred_check_branch
          %432 = sbr.rel (%p430) target = $region16
        $region15: #{tpu_custom_call.1} parent=11 // pred_region
          _
        $region16: #{tpu_custom_call.1} parent=11 // pred_fallthru
          _
        // Predicated region
        $region17: #{tpu_custom_call.1} parent=11 // pred_check
          %p433 = pneg %p103
        $region18: #{tpu_custom_call.1} parent=11 // pred_check_branch
          %435 = sbr.rel (%p433) target = $region20
        $region19: #{tpu_custom_call.1} parent=11 // pred_region
          _
        $region20: #{tpu_custom_call.1} parent=11 // pred_fallthru
          _
      $region12: #{tpu_custom_call.1} parent=5 // pred_fallthru
        _
      %p436 = scmp.lt.s32.totalorder %s23, 4
      // Predicated region
      $region21: #{tpu_custom_call.1} parent=5 // pred_check
        %p437 = pneg %p436
      $region22: #{tpu_custom_call.1} parent=5 // pred_check_branch
        %439 = sbr.rel (%p437) target = $region24
      $region23: #{tpu_custom_call.1} parent=5 // pred_region
        // Predicated region
        $region25: #{tpu_custom_call.1} parent=23 // pred_check
          %p440 = pneg %p55
        $region26: #{tpu_custom_call.1} parent=23 // pred_check_branch
          %442 = sbr.rel (%p440) target = $region28
        $region27: #{tpu_custom_call.1} parent=23 // pred_region
          %p443 = scmp.lt.s32.totalorder %s30, 1
          %s444 = scalar_select %p443, %s30, 1
          %s445 = smul.addr %s444, 8
          %s446 = scalar_lea.vmem %s0, %s445
        $region28: #{tpu_custom_call.1} parent=23 // pred_fallthru
          _
        // Predicated region
        $region29: #{tpu_custom_call.1} parent=23 // pred_check
          %p447 = pneg %p123
        $region30: #{tpu_custom_call.1} parent=23 // pred_check_branch
          %449 = sbr.rel (%p447) target = $region32
        $region31: #{tpu_custom_call.1} parent=23 // pred_region
          %p450 = scmp.lt.s32.totalorder %s31, 1
          %s451 = scalar_select %p450, %s31, 1
          %s452 = scalar_lea.vmem %s3, %s451
        $region32: #{tpu_custom_call.1} parent=23 // pred_fallthru
          _
        // Predicated region
        $region33: #{tpu_custom_call.1} parent=23 // pred_check
          %p453 = pneg %p149
        $region34: #{tpu_custom_call.1} parent=23 // pred_check_branch
          %455 = sbr.rel (%p453) target = $region36
        $region35: #{tpu_custom_call.1} parent=23 // pred_region
          %p456 = scmp.lt.s32.totalorder %s31, 1
          %s457 = scalar_select %p456, %s31, 1
          %s458 = scalar_lea.vmem %s4, %s457
        $region36: #{tpu_custom_call.1} parent=23 // pred_fallthru
          _
        // Predicated region
        $region37: #{tpu_custom_call.1} parent=23 // pred_check
          %p459 = pneg %p175
        $region38: #{tpu_custom_call.1} parent=23 // pred_check_branch
          %461 = sbr.rel (%p459) target = $region40
        $region39: #{tpu_custom_call.1} parent=23 // pred_region
          %p462 = scmp.lt.s32.totalorder %s31, 1
          %s463 = scalar_select %p462, %s31, 1
          %s464 = smul.addr %s463, 8
          %s465 = smul.addr %s464, 8
          %s466 = scalar_lea.vmem %s5, %s465
        $region40: #{tpu_custom_call.1} parent=23 // pred_fallthru
          _
        // Predicated region
        $region41: #{tpu_custom_call.1} parent=23 // pred_check
          %p467 = pneg %p201
        $region42: #{tpu_custom_call.1} parent=23 // pred_check_branch
          %469 = sbr.rel (%p467) target = $region44
        $region43: #{tpu_custom_call.1} parent=23 // pred_region
          %p470 = scmp.lt.s32.totalorder %s31, 1
          %s471 = scalar_select %p470, %s31, 1
          %s472 = smul.addr %s471, 4
          %s473 = smul.addr %s472, 8
          %s474 = scalar_lea.vmem %s6, %s473
        $region44: #{tpu_custom_call.1} parent=23 // pred_fallthru
          _
        // Predicated region
        $region45: #{tpu_custom_call.1} parent=23 // pred_check
          %p475 = pneg %p227
        $region46: #{tpu_custom_call.1} parent=23 // pred_check_branch
          %477 = sbr.rel (%p475) target = $region48
        $region47: #{tpu_custom_call.1} parent=23 // pred_region
          %p478 = scmp.lt.s32.totalorder %s31, 1
          %s479 = scalar_select %p478, %s31, 1
          %s480 = scalar_lea.vmem %s7, %s479
        $region48: #{tpu_custom_call.1} parent=23 // pred_fallthru
          _
        // Predicated region
        $region49: #{tpu_custom_call.1} parent=23 // pred_check
          %p481 = pneg %p253
        $region50: #{tpu_custom_call.1} parent=23 // pred_check_branch
          %483 = sbr.rel (%p481) target = $region52
        $region51: #{tpu_custom_call.1} parent=23 // pred_region
          %p484 = scmp.lt.s32.totalorder %s31, 1
          %s485 = scalar_select %p484, %s31, 1
          %s486 = scalar_lea.vmem %s8, %s485
        $region52: #{tpu_custom_call.1} parent=23 // pred_fallthru
          _
        // Predicated region
        $region53: #{tpu_custom_call.1} parent=23 // pred_check
          %p487 = pneg %p279
        $region54: #{tpu_custom_call.1} parent=23 // pred_check_branch
          %489 = sbr.rel (%p487) target = $region56
        $region55: #{tpu_custom_call.1} parent=23 // pred_region
          %p490 = scmp.lt.s32.totalorder %s31, 1
          %s491 = scalar_select %p490, %s31, 1
          %s492 = scalar_lea.vmem %s9, %s491
        $region56: #{tpu_custom_call.1} parent=23 // pred_fallthru
          _
        // Predicated region
        $region57: #{tpu_custom_call.1} parent=23 // pred_check
          %p493 = pneg %p305
        $region58: #{tpu_custom_call.1} parent=23 // pred_check_branch
          %495 = sbr.rel (%p493) target = $region60
        $region59: #{tpu_custom_call.1} parent=23 // pred_region
          %p496 = scmp.lt.s32.totalorder %s31, 1
          %s497 = scalar_select %p496, %s31, 1
          %s498 = smul.addr %s497, 4
          %s499 = smul.addr %s498, 8
          %s500 = scalar_lea.vmem %s10, %s499
        $region60: #{tpu_custom_call.1} parent=23 // pred_fallthru
          _
        // Predicated region
        $region61: #{tpu_custom_call.1} parent=23 // pred_check
          %p501 = pneg %p331
        $region62: #{tpu_custom_call.1} parent=23 // pred_check_branch
          %503 = sbr.rel (%p501) target = $region64
        $region63: #{tpu_custom_call.1} parent=23 // pred_region
          %p504 = scmp.lt.s32.totalorder %s31, 1
          %s505 = scalar_select %p504, %s31, 1
          %s506 = scalar_lea.vmem %s11, %s505
        $region64: #{tpu_custom_call.1} parent=23 // pred_fallthru
          _
        // Predicated region
        $region65: #{tpu_custom_call.1} parent=23 // pred_check
          %p507 = pneg %p357
        $region66: #{tpu_custom_call.1} parent=23 // pred_check_branch
          %509 = sbr.rel (%p507) target = $region68
        $region67: #{tpu_custom_call.1} parent=23 // pred_region
          %p510 = scmp.lt.s32.totalorder %s31, 1
          %s511 = scalar_select %p510, %s31, 1
          %s512 = smul.addr %s511, 16
          %s513 = smul.addr %s512, 8
          %s514 = scalar_lea.vmem %s12, %s513
        $region68: #{tpu_custom_call.1} parent=23 // pred_fallthru
          _
        // Predicated region
        $region69: #{tpu_custom_call.1} parent=23 // pred_check
          %p515 = pneg %p383
        $region70: #{tpu_custom_call.1} parent=23 // pred_check_branch
          %517 = sbr.rel (%p515) target = $region72
        $region71: #{tpu_custom_call.1} parent=23 // pred_region
          %p518 = scmp.lt.s32.totalorder %s31, 1
          %s519 = scalar_select %p518, %s31, 1
          %s520 = scalar_lea.vmem %s13, %s519
        $region72: #{tpu_custom_call.1} parent=23 // pred_fallthru
          _
      $region24: #{tpu_custom_call.1} parent=5 // pred_fallthru
        _
      %p521 = scmp.le.s32.totalorder 1, %s23
      %p522 = scmp.lt.s32.totalorder %s23, 5
      %p523 = pnand %p521, %p522
      %p524 = pneg %p523
      // Predicated region
      $region73: #{tpu_custom_call.1} parent=5 // pred_check
        _
      $region74: #{tpu_custom_call.1} parent=5 // pred_check_branch
        %526 = sbr.rel (%p523) target = $region76
      $region75: #{tpu_custom_call.1} parent=5 // pred_region
        %s527 = ssub.s32 %s23, 1
        %p528 = scmp.lt.s32.totalorder %s32, 1
        %s529 = scalar_select %p528, %s32, 1
        %s530 = smul.addr %s529, 8
        %s531 = scalar_lea.vmem %s0, %s530
        %p532 = pneg %p61
        %p533 = pneg %p58
        %p534 = pneg %p82
        %p535 = pneg %p79
        %p536 = pneg %p103
        %p537 = pneg %p100
        %p538 = scmp.lt.s32.totalorder %s33, 1
        %s539 = scalar_select %p538, %s33, 1
        %s540 = scalar_lea.vmem %s3, %s539
        %p541 = pneg %p129
        %p542 = pneg %p126
        %p543 = scmp.lt.s32.totalorder %s33, 1
        %s544 = scalar_select %p543, %s33, 1
        %s545 = scalar_lea.vmem %s4, %s544
        %p546 = pneg %p155
        %p547 = pneg %p152
        %p548 = scmp.lt.s32.totalorder %s33, 1
        %s549 = scalar_select %p548, %s33, 1
        %s550 = smul.addr %s549, 8
        %s551 = smul.addr %s550, 8
        %s552 = scalar_lea.vmem %s5, %s551
        %p553 = pneg %p181
        %p554 = pneg %p178
        %p555 = scmp.lt.s32.totalorder %s33, 1
        %s556 = scalar_select %p555, %s33, 1
        %s557 = smul.addr %s556, 4
        %s558 = smul.addr %s557, 8
        %s559 = scalar_lea.vmem %s6, %s558
        %p560 = pneg %p207
        %p561 = pneg %p204
        %p562 = scmp.lt.s32.totalorder %s33, 1
        %s563 = scalar_select %p562, %s33, 1
        %s564 = scalar_lea.vmem %s7, %s563
        %p565 = pneg %p233
        %p566 = pneg %p230
        %p567 = scmp.lt.s32.totalorder %s33, 1
        %s568 = scalar_select %p567, %s33, 1
        %s569 = scalar_lea.vmem %s8, %s568
        %p570 = pneg %p259
        %p571 = pneg %p256
        %p572 = scmp.lt.s32.totalorder %s33, 1
        %s573 = scalar_select %p572, %s33, 1
        %s574 = scalar_lea.vmem %s9, %s573
        %p575 = pneg %p285
        %p576 = pneg %p282
        %p577 = scmp.lt.s32.totalorder %s33, 1
        %s578 = scalar_select %p577, %s33, 1
        %s579 = smul.addr %s578, 4
        %s580 = smul.addr %s579, 8
        %s581 = scalar_lea.vmem %s10, %s580
        %p582 = pneg %p311
        %p583 = pneg %p308
        %p584 = scmp.lt.s32.totalorder %s33, 1
        %s585 = scalar_select %p584, %s33, 1
        %s586 = scalar_lea.vmem %s11, %s585
        %p587 = pneg %p337
        %p588 = pneg %p334
        %p589 = scmp.lt.s32.totalorder %s33, 1
        %s590 = scalar_select %p589, %s33, 1
        %s591 = smul.addr %s590, 16
        %s592 = smul.addr %s591, 8
        %s593 = scalar_lea.vmem %s12, %s592
        %p594 = pneg %p363
        %p595 = pneg %p360
        %p596 = scmp.lt.s32.totalorder %s33, 1
        %s597 = scalar_select %p596, %s33, 1
        %s598 = scalar_lea.vmem %s13, %s597
        %p599 = pneg %p389
        %p600 = pneg %p386
        %p601 = pneg %p415
        %p602 = pneg %p412
        %s603 = sand.u32 %s402, 1
        %s604 = scalar_lea.sflag [#allocation3], %s603
        %s605 = sand.u32 %s402, 1
        %s606 = smul.addr %s605, 8
        %s607 = scalar_lea.vmem [#allocation2], %s606
        %p608 = scmp.lt.s32.totalorder %s32, 1
        %s609 = scalar_select %p608, %s32, 1
        %s610 = smul.addr %s609, 8
        %s611 = scalar_lea.vmem %s0, %s610
        %p612 = scmp.lt.s32.totalorder %s33, 1
        %s613 = scalar_select %p612, %s33, 1
        %s614 = scalar_lea.vmem %s3, %s613
        %p615 = scmp.lt.s32.totalorder %s33, 1
        %s616 = scalar_select %p615, %s33, 1
        %s617 = scalar_lea.vmem %s4, %s616
        %p618 = scmp.lt.s32.totalorder %s33, 1
        %s619 = scalar_select %p618, %s33, 1
        %s620 = smul.addr %s619, 8
        %s621 = smul.addr %s620, 8
        %s622 = scalar_lea.vmem %s5, %s621
        %p623 = scmp.lt.s32.totalorder %s33, 1
        %s624 = scalar_select %p623, %s33, 1
        %s625 = smul.addr %s624, 4
        %s626 = smul.addr %s625, 8
        %s627 = scalar_lea.vmem %s6, %s626
        %p628 = scmp.lt.s32.totalorder %s33, 1
        %s629 = scalar_select %p628, %s33, 1
        %s630 = scalar_lea.vmem %s7, %s629
        %p631 = scmp.lt.s32.totalorder %s33, 1
        %s632 = scalar_select %p631, %s33, 1
        %s633 = scalar_lea.vmem %s8, %s632
        %p634 = scmp.lt.s32.totalorder %s33, 1
        %s635 = scalar_select %p634, %s33, 1
        %s636 = scalar_lea.vmem %s9, %s635
        %p637 = scmp.lt.s32.totalorder %s33, 1
        %s638 = scalar_select %p637, %s33, 1
        %s639 = smul.addr %s638, 4
        %s640 = smul.addr %s639, 8
        %s641 = scalar_lea.vmem %s10, %s640
        %p642 = scmp.lt.s32.totalorder %s33, 1
        %s643 = scalar_select %p642, %s33, 1
        %s644 = scalar_lea.vmem %s11, %s643
        %p645 = scmp.lt.s32.totalorder %s33, 1
        %s646 = scalar_select %p645, %s33, 1
        %s647 = smul.addr %s646, 16
        %s648 = smul.addr %s647, 8
        %s649 = scalar_lea.vmem %s12, %s648
        %p650 = scmp.lt.s32.totalorder %s33, 1
        %s651 = scalar_select %p650, %s33, 1
        %s652 = scalar_lea.vmem %s13, %s651
        %p653 = scmp.eq.s32.totalorder %s33, 0
        // Predicated region
        $region77: #{tpu_custom_call.1} parent=75 // pred_check
          %p654 = pneg %p653
        $region78: #{tpu_custom_call.1} parent=75 // pred_check_branch
          %656 = sbr.rel (%p654) target = $region80
        $region79: #{tpu_custom_call.1} parent=75 // pred_region
          %v657 = vld [vmem:[%s611] sm:$0xff]
          %vm658 = vcmask 261120
          %659 = vst.msk [vmem:[%s607] sm:$0xff] %vm658, %v657
        $region80: #{tpu_custom_call.1} parent=75 // pred_fallthru
          _
        %v660 = vld [vmem:[%s607] sm:$0xff]
        %v661 = vld [vmem:[%s614] sm:$0x1]
        %v662 = vld [vmem:[%s617] sm:$0x1]
        %vm663 = vcmask 261120
        %v664 = vsel %vm663, %v660, 0.0
        %665 = vadd.xlane.f32.xlu0 %v664
        %v666 = vpop.xlane.xlu0 %665
        %v667 = vrcp.pop 32.0
        %v668 = vmul.f32 %v666, %v667
        %v669 = vsub.f32 %v660, %v668
        %v670 = vmul.f32 %v669, %v669
        %v671 = vsel %vm663, %v670, 0.0
        %672 = vadd.xlane.f32.xlu0 %v671
        %v673 = vpop.xlane.xlu0 %672
        %v674 = vmul.f32 %v673, %v667
        %v675 = vadd.f32 %v674, 1e-05
        %v676 = vrsqrt.pop %v675
        %v677 = vmul.f32 %v669, %v676
        %v679 = vlaneseq
        %v680 = vshrl.u32 %v679, 7
        %v681 = vsub.s32 0, %v680
        %v682 = vrot.slane %v661, %v681
        %v684 = vmul.f32 %v677, %v682
        %v686 = vlaneseq
        %v687 = vshrl.u32 %v686, 7
        %v688 = vsub.s32 0, %v687
        %v689 = vrot.slane %v662, %v688
        %v691 = vadd.f32 %v684, %v689
        %v692 = vld [vmem:[%s622] sm:$0xff]
        %v693 = vld [vmem:[%s622 + $0x8] sm:$0xff]
        %v694 = vld [vmem:[%s622 + $0x10] sm:$0xff]
        %v695 = vld [vmem:[%s622 + $0x18] sm:$0xff]
        %v696 = vld [vmem:[%s622 + $0x20] sm:$0xff]
        %v697 = vld [vmem:[%s622 + $0x28] sm:$0xff]
        %v698 = vld [vmem:[%s622 + $0x30] sm:$0xff]
        %v699 = vld [vmem:[%s622 + $0x38] sm:$0xff]
        %v701 = vsel %vm663, %v691, 0
        %703 = vmatprep.subr.mxu0 %v693
        %704 = vmatpush1.msra.mxu0 %v692
        %705 = vmatprep.subr.mxu0 %v695
        %706 = vmatpush1.msra.mxu0 %v694
        %707 = vmatprep.subr.mxu0 %v697
        %708 = vmatpush1.msra.mxu0 %v696
        %709 = vmatprep.subr.mxu0 %v699
        %710 = vmatpush1.msra.mxu0 %v698
        %711 = vmatprep.subr.mxu0 0.0
        %712 = vmatpush1.msra.mxu0 0.0
        %713 = vmatprep.subr.mxu0 0.0
        %714 = vmatpush1.msra.mxu0 0.0
        %715 = vmatprep.subr.mxu0 0.0
        %716 = vmatpush1.msra.mxu0 0.0
        %717 = vmatprep.subr.mxu0 0.0
        %718 = vmatpush1.msra.mxu0 0.0
        %719 = vmatprep.subr.mxu0 0.0
        %720 = vmatpush1.msra.mxu0 0.0
        %721 = vmatprep.subr.mxu0 0.0
        %722 = vmatpush1.msra.mxu0 0.0
        %723 = vmatprep.subr.mxu0 0.0
        %724 = vmatpush1.msra.mxu0 0.0
        %725 = vmatprep.subr.mxu0 0.0
        %726 = vmatpush1.msra.mxu0 0.0
        %727 = vmatprep.subr.mxu0 0.0
        %728 = vmatpush1.msra.mxu0 0.0
        %729 = vmatprep.subr.mxu0 0.0
        %730 = vmatpush1.msra.mxu0 0.0
        %731 = vmatprep.subr.mxu0 0.0
        %732 = vmatpush1.msra.mxu0 0.0
        %733 = vmatprep.subr.mxu0 0.0
        %734 = vmatpush1.msra.mxu0 0.0
        %735 = vmatprep.subr.mxu0 0.0
        %736 = vmatpush1.msra.mxu0 0.0
        %737 = vmatprep.subr.mxu0 0.0
        %738 = vmatpush1.msra.mxu0 0.0
        %739 = vmatprep.subr.mxu0 0.0
        %740 = vmatpush1.msra.mxu0 0.0
        %741 = vmatprep.subr.mxu0 0.0
        %742 = vmatpush1.msra.mxu0 0.0
        %743 = vmatprep.subr.mxu0 0.0
        %744 = vmatpush1.msra.mxu0 0.0
        %745 = vmatprep.subr.mxu0 0.0
        %746 = vmatpush1.msra.mxu0 0.0
        %747 = vmatprep.subr.mxu0 0.0
        %748 = vmatpush1.msra.mxu0 0.0
        %749 = vmatprep.subr.mxu0 0.0
        %750 = vmatpush1.msra.mxu0 0.0
        %751 = vmatprep.subr.mxu0 0.0
        %752 = vmatpush1.msra.mxu0 0.0
        %753 = vmatprep.subr.mxu0 0.0
        %754 = vmatpush1.msra.mxu0 0.0
        %755 = vmatprep.subr.mxu0 0.0
        %756 = vmatpush1.msra.mxu0 0.0
        %757 = vmatprep.subr.mxu0 0.0
        %758 = vmatpush1.msra.mxu0 0.0
        %759 = vmatprep.subr.mxu0 0.0
        %760 = vmatpush1.msra.mxu0 0.0
        %761 = vmatprep.subr.mxu0 0.0
        %762 = vmatpush1.msra.mxu0 0.0
        %763 = vmatprep.subr.mxu0 0.0
        %764 = vmatpush1.msra.mxu0 0.0
        %765 = vmatprep.subr.mxu0 0.0
        %766 = vmatpush1.msra.mxu0 0.0
        %767 = vmatprep.mubr.f32.mxu0 0.0
        %768 = vmatmul.mubr.f32.gmra.mrb[0].mxu0 %v701
        %v769 = vpop.f32.mrb[0].mxu0
        %v770 = vadd.f32 0.0, %v769
        %v771 = vpop.f32.mrb[0].mxu0
        %v772 = vadd.f32 0.0, %v771
        %773 = vdwg.mxu0
        %v774 = vld [vmem:[%s1] sm:$0xff]
        %v775 = vld [vmem:[%s2] sm:$0xff]
        %v776 = vmul.f32 %v770, %v774
        %778 = vrot.lane.b32.xlu0 %v775, 32
        %v779 = vpop.permute.xlu0 %778
        %v781 = vmul.f32 %v770, %v779
        %783 = vrot.lane.b32.xlu0 %v781, 96
        %v784 = vpop.permute.xlu0 %783
        %v786 = vadd.f32 %v776, %v784
        %v787 = vmul.f32 %v786, 0.35355338
        %789 = vrot.lane.b32.xlu0 %v774, 64
        %v790 = vpop.permute.xlu0 %789
        %v792 = vmul.f32 %v770, %v790
        %793 = vrot.lane.b32.xlu0 %v775, 96
        %v794 = vpop.permute.xlu0 %793
        %v796 = vmul.f32 %v770, %v794
        %798 = vrot.lane.b32.xlu0 %v796, 96
        %v799 = vpop.permute.xlu0 %798
        %v801 = vadd.f32 %v792, %v799
        %v802 = vlaneseq
        %v803 = vshrl.u32 %v802, 7
        %v804 = vlaneseq
        %v805 = vand.u32 %v804, 127
        %vm806 = vcmp.le.s32.totalorder %v805, %v803
        %808 = vrot.lane.b32.xlu0 %v801, 64
        %v809 = vpop.permute.xlu0 %808
        %vm810 = vcmask 64512
        %v812 = vsel %vm810, %v787, 0
        %v814 = vsel %vm810, %v809, 0
        %816 = vmatprep.subr.mxu0 0.0
        %817 = vmatpush1.xpose.msra.mxu0 %v814
        %818 = vmatprep.subr.mxu0 0.0
        %819 = vmatpush1.xpose.msra.mxu0 0.0
        %820 = vmatprep.subr.mxu0 0.0
        %821 = vmatpush1.xpose.msra.mxu0 0.0
        %822 = vmatprep.subr.mxu0 0.0
        %823 = vmatpush1.xpose.msra.mxu0 0.0
        %824 = vmatprep.subr.mxu0 0.0
        %825 = vmatpush1.xpose.msra.mxu0 0.0
        %826 = vmatprep.subr.mxu0 0.0
        %827 = vmatpush1.xpose.msra.mxu0 0.0
        %828 = vmatprep.subr.mxu0 0.0
        %829 = vmatpush1.xpose.msra.mxu0 0.0
        %830 = vmatprep.subr.mxu0 0.0
        %831 = vmatpush1.xpose.msra.mxu0 0.0
        %832 = vmatprep.subr.mxu0 0.0
        %833 = vmatpush1.xpose.msra.mxu0 0.0
        %834 = vmatprep.subr.mxu0 0.0
        %835 = vmatpush1.xpose.msra.mxu0 0.0
        %836 = vmatprep.subr.mxu0 0.0
        %837 = vmatpush1.xpose.msra.mxu0 0.0
        %838 = vmatprep.subr.mxu0 0.0
        %839 = vmatpush1.xpose.msra.mxu0 0.0
        %840 = vmatprep.subr.mxu0 0.0
        %841 = vmatpush1.xpose.msra.mxu0 0.0
        %842 = vmatprep.subr.mxu0 0.0
        %843 = vmatpush1.xpose.msra.mxu0 0.0
        %844 = vmatprep.subr.mxu0 0.0
        %845 = vmatpush1.xpose.msra.mxu0 0.0
        %846 = vmatprep.subr.mxu0 0.0
        %847 = vmatpush1.xpose.msra.mxu0 0.0
        %848 = vmatprep.subr.mxu0 0.0
        %849 = vmatpush1.xpose.msra.mxu0 0.0
        %850 = vmatprep.subr.mxu0 0.0
        %851 = vmatpush1.xpose.msra.mxu0 0.0
        %852 = vmatprep.subr.mxu0 0.0
        %853 = vmatpush1.xpose.msra.mxu0 0.0
        %854 = vmatprep.subr.mxu0 0.0
        %855 = vmatpush1.xpose.msra.mxu0 0.0
        %856 = vmatprep.subr.mxu0 0.0
        %857 = vmatpush1.xpose.msra.mxu0 0.0
        %858 = vmatprep.subr.mxu0 0.0
        %859 = vmatpush1.xpose.msra.mxu0 0.0
        %860 = vmatprep.subr.mxu0 0.0
        %861 = vmatpush1.xpose.msra.mxu0 0.0
        %862 = vmatprep.subr.mxu0 0.0
        %863 = vmatpush1.xpose.msra.mxu0 0.0
        %864 = vmatprep.subr.mxu0 0.0
        %865 = vmatpush1.xpose.msra.mxu0 0.0
        %866 = vmatprep.subr.mxu0 0.0
        %867 = vmatpush1.xpose.msra.mxu0 0.0
        %868 = vmatprep.subr.mxu0 0.0
        %869 = vmatpush1.xpose.msra.mxu0 0.0
        %870 = vmatprep.subr.mxu0 0.0
        %871 = vmatpush1.xpose.msra.mxu0 0.0
        %872 = vmatprep.subr.mxu0 0.0
        %873 = vmatpush1.xpose.msra.mxu0 0.0
        %874 = vmatprep.subr.mxu0 0.0
        %875 = vmatpush1.xpose.msra.mxu0 0.0
        %876 = vmatprep.subr.mxu0 0.0
        %877 = vmatpush1.xpose.msra.mxu0 0.0
        %878 = vmatprep.subr.mxu0 0.0
        %879 = vmatpush1.xpose.msra.mxu0 0.0
        %880 = vmatprep.mubr.f32.mxu0 0.0
        %881 = vmatmul.mubr.f32.gmra.mrb[0].mxu0 %v812
        %v882 = vpop.f32.mrb[0].mxu0
        %v883 = vadd.f32 0.0, %v882
        %v884 = vpop.f32.mrb[0].mxu0
        %885 = vdwg.mxu0
        %v886 = vsel %vm806, %v883, -inf
        %v887 = vsel %vm810, %v886, -inf
        %888 = vmax.xlane.f32.xlu0 %v887
        %v889 = vpop.xlane.xlu0 %888
        %v890 = vsub.f32 %v886, %v889
        %v891 = vmul.f32 %v890, 1.442695
        %v892 = vpow.pop %v891
        %v893 = vsel %vm810, %v892, 0.0
        %894 = vadd.xlane.f32.xlu0 %v893
        %v895 = vpop.xlane.xlu0 %894
        %v896 = vrcp.pop %v895
        %v897 = vmul.f32 %v892, %v896
        %v899 = vsel %vm810, %v897, 0
        %901 = vmatprep.subr.mxu0 0.0
        %902 = vmatpush1.msra.mxu0 %v772
        %903 = vmatprep.subr.mxu0 0.0
        %904 = vmatpush1.msra.mxu0 0.0
        %905 = vmatprep.subr.mxu0 0.0
        %906 = vmatpush1.msra.mxu0 0.0
        %907 = vmatprep.subr.mxu0 0.0
        %908 = vmatpush1.msra.mxu0 0.0
        %909 = vmatprep.subr.mxu0 0.0
        %910 = vmatpush1.msra.mxu0 0.0
        %911 = vmatprep.subr.mxu0 0.0
        %912 = vmatpush1.msra.mxu0 0.0
        %913 = vmatprep.subr.mxu0 0.0
        %914 = vmatpush1.msra.mxu0 0.0
        %915 = vmatprep.subr.mxu0 0.0
        %916 = vmatpush1.msra.mxu0 0.0
        %917 = vmatprep.subr.mxu0 0.0
        %918 = vmatpush1.msra.mxu0 0.0
        %919 = vmatprep.subr.mxu0 0.0
        %920 = vmatpush1.msra.mxu0 0.0
        %921 = vmatprep.subr.mxu0 0.0
        %922 = vmatpush1.msra.mxu0 0.0
        %923 = vmatprep.subr.mxu0 0.0
        %924 = vmatpush1.msra.mxu0 0.0
        %925 = vmatprep.subr.mxu0 0.0
        %926 = vmatpush1.msra.mxu0 0.0
        %927 = vmatprep.subr.mxu0 0.0
        %928 = vmatpush1.msra.mxu0 0.0
        %929 = vmatprep.subr.mxu0 0.0
        %930 = vmatpush1.msra.mxu0 0.0
        %931 = vmatprep.subr.mxu0 0.0
        %932 = vmatpush1.msra.mxu0 0.0
        %933 = vmatprep.subr.mxu0 0.0
        %934 = vmatpush1.msra.mxu0 0.0
        %935 = vmatprep.subr.mxu0 0.0
        %936 = vmatpush1.msra.mxu0 0.0
        %937 = vmatprep.subr.mxu0 0.0
        %938 = vmatpush1.msra.mxu0 0.0
        %939 = vmatprep.subr.mxu0 0.0
        %940 = vmatpush1.msra.mxu0 0.0
        %941 = vmatprep.subr.mxu0 0.0
        %942 = vmatpush1.msra.mxu0 0.0
        %943 = vmatprep.subr.mxu0 0.0
        %944 = vmatpush1.msra.mxu0 0.0
        %945 = vmatprep.subr.mxu0 0.0
        %946 = vmatpush1.msra.mxu0 0.0
        %947 = vmatprep.subr.mxu0 0.0
        %948 = vmatpush1.msra.mxu0 0.0
        %949 = vmatprep.subr.mxu0 0.0
        %950 = vmatpush1.msra.mxu0 0.0
        %951 = vmatprep.subr.mxu0 0.0
        %952 = vmatpush1.msra.mxu0 0.0
        %953 = vmatprep.subr.mxu0 0.0
        %954 = vmatpush1.msra.mxu0 0.0
        %955 = vmatprep.subr.mxu0 0.0
        %956 = vmatpush1.msra.mxu0 0.0
        %957 = vmatprep.subr.mxu0 0.0
        %958 = vmatpush1.msra.mxu0 0.0
        %959 = vmatprep.subr.mxu0 0.0
        %960 = vmatpush1.msra.mxu0 0.0
        %961 = vmatprep.subr.mxu0 0.0
        %962 = vmatpush1.msra.mxu0 0.0
        %963 = vmatprep.subr.mxu0 0.0
        %964 = vmatpush1.msra.mxu0 0.0
        %965 = vmatprep.mubr.f32.mxu0 0.0
        %966 = vmatmul.mubr.f32.gmra.mrb[0].mxu0 %v899
        %v967 = vpop.f32.mrb[0].mxu0
        %v968 = vadd.f32 0.0, %v967
        %v969 = vpop.f32.mrb[0].mxu0
        %970 = vdwg.mxu0
        %971 = vrot.lane.b32.xlu0 %v787, 120
        %v972 = vpop.permute.xlu0 %971
        %973 = vrot.lane.b32.xlu0 %v801, 56
        %v974 = vpop.permute.xlu0 %973
        %v975 = vsel %vm810, %v972, 0
        %v977 = vsel %vm810, %v974, 0
        %979 = vmatprep.subr.mxu0 0.0
        %980 = vmatpush1.xpose.msra.mxu0 %v977
        %981 = vmatprep.subr.mxu0 0.0
        %982 = vmatpush1.xpose.msra.mxu0 0.0
        %983 = vmatprep.subr.mxu0 0.0
        %984 = vmatpush1.xpose.msra.mxu0 0.0
        %985 = vmatprep.subr.mxu0 0.0
        %986 = vmatpush1.xpose.msra.mxu0 0.0
        %987 = vmatprep.subr.mxu0 0.0
        %988 = vmatpush1.xpose.msra.mxu0 0.0
        %989 = vmatprep.subr.mxu0 0.0
        %990 = vmatpush1.xpose.msra.mxu0 0.0
        %991 = vmatprep.subr.mxu0 0.0
        %992 = vmatpush1.xpose.msra.mxu0 0.0
        %993 = vmatprep.subr.mxu0 0.0
        %994 = vmatpush1.xpose.msra.mxu0 0.0
        %995 = vmatprep.subr.mxu0 0.0
        %996 = vmatpush1.xpose.msra.mxu0 0.0
        %997 = vmatprep.subr.mxu0 0.0
        %998 = vmatpush1.xpose.msra.mxu0 0.0
        %999 = vmatprep.subr.mxu0 0.0
        %1000 = vmatpush1.xpose.msra.mxu0 0.0
        %1001 = vmatprep.subr.mxu0 0.0
        %1002 = vmatpush1.xpose.msra.mxu0 0.0
        %1003 = vmatprep.subr.mxu0 0.0
        %1004 = vmatpush1.xpose.msra.mxu0 0.0
        %1005 = vmatprep.subr.mxu0 0.0
        %1006 = vmatpush1.xpose.msra.mxu0 0.0
        %1007 = vmatprep.subr.mxu0 0.0
        %1008 = vmatpush1.xpose.msra.mxu0 0.0
        %1009 = vmatprep.subr.mxu0 0.0
        %1010 = vmatpush1.xpose.msra.mxu0 0.0
        %1011 = vmatprep.subr.mxu0 0.0
        %1012 = vmatpush1.xpose.msra.mxu0 0.0
        %1013 = vmatprep.subr.mxu0 0.0
        %1014 = vmatpush1.xpose.msra.mxu0 0.0
        %1015 = vmatprep.subr.mxu0 0.0
        %1016 = vmatpush1.xpose.msra.mxu0 0.0
        %1017 = vmatprep.subr.mxu0 0.0
        %1018 = vmatpush1.xpose.msra.mxu0 0.0
        %1019 = vmatprep.subr.mxu0 0.0
        %1020 = vmatpush1.xpose.msra.mxu0 0.0
        %1021 = vmatprep.subr.mxu0 0.0
        %1022 = vmatpush1.xpose.msra.mxu0 0.0
        %1023 = vmatprep.subr.mxu0 0.0
        %1024 = vmatpush1.xpose.msra.mxu0 0.0
        %1025 = vmatprep.subr.mxu0 0.0
        %1026 = vmatpush1.xpose.msra.mxu0 0.0
        %1027 = vmatprep.subr.mxu0 0.0
        %1028 = vmatpush1.xpose.msra.mxu0 0.0
        %1029 = vmatprep.subr.mxu0 0.0
        %1030 = vmatpush1.xpose.msra.mxu0 0.0
        %1031 = vmatprep.subr.mxu0 0.0
        %1032 = vmatpush1.xpose.msra.mxu0 0.0
        %1033 = vmatprep.subr.mxu0 0.0
        %1034 = vmatpush1.xpose.msra.mxu0 0.0
        %1035 = vmatprep.subr.mxu0 0.0
        %1036 = vmatpush1.xpose.msra.mxu0 0.0
        %1037 = vmatprep.subr.mxu0 0.0
        %1038 = vmatpush1.xpose.msra.mxu0 0.0
        %1039 = vmatprep.subr.mxu0 0.0
        %1040 = vmatpush1.xpose.msra.mxu0 0.0
        %1041 = vmatprep.subr.mxu0 0.0
        %1042 = vmatpush1.xpose.msra.mxu0 0.0
        %1043 = vmatprep.mubr.f32.mxu0 0.0
        %1044 = vmatmul.mubr.f32.gmra.mrb[0].mxu0 %v975
        %v1045 = vpop.f32.mrb[0].mxu0
        %v1046 = vadd.f32 0.0, %v1045
        %v1047 = vpop.f32.mrb[0].mxu0
        %1048 = vdwg.mxu0
        %v1049 = vsel %vm806, %v1046, -inf
        %v1050 = vsel %vm810, %v1049, -inf
        %1051 = vmax.xlane.f32.xlu0 %v1050
        %v1052 = vpop.xlane.xlu0 %1051
        %v1053 = vsub.f32 %v1049, %v1052
        %v1054 = vmul.f32 %v1053, 1.442695
        %v1055 = vpow.pop %v1054
        %v1056 = vsel %vm810, %v1055, 0.0
        %1057 = vadd.xlane.f32.xlu0 %v1056
        %v1058 = vpop.xlane.xlu0 %1057
        %v1059 = vrcp.pop %v1058
        %v1060 = vmul.f32 %v1055, %v1059
        %1062 = vrot.lane.b32.xlu0 %v772, 120
        %v1063 = vpop.permute.xlu0 %1062
        %v1066 = vsel %vm810, %v1060, 0
        %1068 = vmatprep.subr.mxu0 0.0
        %1069 = vmatpush1.msra.mxu0 %v1063
        %1070 = vmatprep.subr.mxu0 0.0
        %1071 = vmatpush1.msra.mxu0 0.0
        %1072 = vmatprep.subr.mxu0 0.0
        %1073 = vmatpush1.msra.mxu0 0.0
        %1074 = vmatprep.subr.mxu0 0.0
        %1075 = vmatpush1.msra.mxu0 0.0
        %1076 = vmatprep.subr.mxu0 0.0
        %1077 = vmatpush1.msra.mxu0 0.0
        %1078 = vmatprep.subr.mxu0 0.0
        %1079 = vmatpush1.msra.mxu0 0.0
        %1080 = vmatprep.subr.mxu0 0.0
        %1081 = vmatpush1.msra.mxu0 0.0
        %1082 = vmatprep.subr.mxu0 0.0
        %1083 = vmatpush1.msra.mxu0 0.0
        %1084 = vmatprep.subr.mxu0 0.0
        %1085 = vmatpush1.msra.mxu0 0.0
        %1086 = vmatprep.subr.mxu0 0.0
        %1087 = vmatpush1.msra.mxu0 0.0
        %1088 = vmatprep.subr.mxu0 0.0
        %1089 = vmatpush1.msra.mxu0 0.0
        %1090 = vmatprep.subr.mxu0 0.0
        %1091 = vmatpush1.msra.mxu0 0.0
        %1092 = vmatprep.subr.mxu0 0.0
        %1093 = vmatpush1.msra.mxu0 0.0
        %1094 = vmatprep.subr.mxu0 0.0
        %1095 = vmatpush1.msra.mxu0 0.0
        %1096 = vmatprep.subr.mxu0 0.0
        %1097 = vmatpush1.msra.mxu0 0.0
        %1098 = vmatprep.subr.mxu0 0.0
        %1099 = vmatpush1.msra.mxu0 0.0
        %1100 = vmatprep.subr.mxu0 0.0
        %1101 = vmatpush1.msra.mxu0 0.0
        %1102 = vmatprep.subr.mxu0 0.0
        %1103 = vmatpush1.msra.mxu0 0.0
        %1104 = vmatprep.subr.mxu0 0.0
        %1105 = vmatpush1.msra.mxu0 0.0
        %1106 = vmatprep.subr.mxu0 0.0
        %1107 = vmatpush1.msra.mxu0 0.0
        %1108 = vmatprep.subr.mxu0 0.0
        %1109 = vmatpush1.msra.mxu0 0.0
        %1110 = vmatprep.subr.mxu0 0.0
        %1111 = vmatpush1.msra.mxu0 0.0
        %1112 = vmatprep.subr.mxu0 0.0
        %1113 = vmatpush1.msra.mxu0 0.0
        %1114 = vmatprep.subr.mxu0 0.0
        %1115 = vmatpush1.msra.mxu0 0.0
        %1116 = vmatprep.subr.mxu0 0.0
        %1117 = vmatpush1.msra.mxu0 0.0
        %1118 = vmatprep.subr.mxu0 0.0
        %1119 = vmatpush1.msra.mxu0 0.0
        %1120 = vmatprep.subr.mxu0 0.0
        %1121 = vmatpush1.msra.mxu0 0.0
        %1122 = vmatprep.subr.mxu0 0.0
        %1123 = vmatpush1.msra.mxu0 0.0
        %1124 = vmatprep.subr.mxu0 0.0
        %1125 = vmatpush1.msra.mxu0 0.0
        %1126 = vmatprep.subr.mxu0 0.0
        %1127 = vmatpush1.msra.mxu0 0.0
        %1128 = vmatprep.subr.mxu0 0.0
        %1129 = vmatpush1.msra.mxu0 0.0
        %1130 = vmatprep.subr.mxu0 0.0
        %1131 = vmatpush1.msra.mxu0 0.0
        %1132 = vmatprep.mubr.f32.mxu0 0.0
        %1133 = vmatmul.mubr.f32.gmra.mrb[0].mxu0 %v1066
        %v1134 = vpop.f32.mrb[0].mxu0
        %v1135 = vadd.f32 0.0, %v1134
        %v1136 = vpop.f32.mrb[0].mxu0
        %1137 = vdwg.mxu0
        %1138 = vrot.lane.b32.xlu0 %v787, 112
        %v1139 = vpop.permute.xlu0 %1138
        %1140 = vrot.lane.b32.xlu0 %v801, 48
        %v1141 = vpop.permute.xlu0 %1140
        %v1142 = vsel %vm810, %v1139, 0
        %v1144 = vsel %vm810, %v1141, 0
        %1146 = vmatprep.subr.mxu0 0.0
        %1147 = vmatpush1.xpose.msra.mxu0 %v1144
        %1148 = vmatprep.subr.mxu0 0.0
        %1149 = vmatpush1.xpose.msra.mxu0 0.0
        %1150 = vmatprep.subr.mxu0 0.0
        %1151 = vmatpush1.xpose.msra.mxu0 0.0
        %1152 = vmatprep.subr.mxu0 0.0
        %1153 = vmatpush1.xpose.msra.mxu0 0.0
        %1154 = vmatprep.subr.mxu0 0.0
        %1155 = vmatpush1.xpose.msra.mxu0 0.0
        %1156 = vmatprep.subr.mxu0 0.0
        %1157 = vmatpush1.xpose.msra.mxu0 0.0
        %1158 = vmatprep.subr.mxu0 0.0
        %1159 = vmatpush1.xpose.msra.mxu0 0.0
        %1160 = vmatprep.subr.mxu0 0.0
        %1161 = vmatpush1.xpose.msra.mxu0 0.0
        %1162 = vmatprep.subr.mxu0 0.0
        %1163 = vmatpush1.xpose.msra.mxu0 0.0
        %1164 = vmatprep.subr.mxu0 0.0
        %1165 = vmatpush1.xpose.msra.mxu0 0.0
        %1166 = vmatprep.subr.mxu0 0.0
        %1167 = vmatpush1.xpose.msra.mxu0 0.0
        %1168 = vmatprep.subr.mxu0 0.0
        %1169 = vmatpush1.xpose.msra.mxu0 0.0
        %1170 = vmatprep.subr.mxu0 0.0
        %1171 = vmatpush1.xpose.msra.mxu0 0.0
        %1172 = vmatprep.subr.mxu0 0.0
        %1173 = vmatpush1.xpose.msra.mxu0 0.0
        %1174 = vmatprep.subr.mxu0 0.0
        %1175 = vmatpush1.xpose.msra.mxu0 0.0
        %1176 = vmatprep.subr.mxu0 0.0
        %1177 = vmatpush1.xpose.msra.mxu0 0.0
        %1178 = vmatprep.subr.mxu0 0.0
        %1179 = vmatpush1.xpose.msra.mxu0 0.0
        %1180 = vmatprep.subr.mxu0 0.0
        %1181 = vmatpush1.xpose.msra.mxu0 0.0
        %1182 = vmatprep.subr.mxu0 0.0
        %1183 = vmatpush1.xpose.msra.mxu0 0.0
        %1184 = vmatprep.subr.mxu0 0.0
        %1185 = vmatpush1.xpose.msra.mxu0 0.0
        %1186 = vmatprep.subr.mxu0 0.0
        %1187 = vmatpush1.xpose.msra.mxu0 0.0
        %1188 = vmatprep.subr.mxu0 0.0
        %1189 = vmatpush1.xpose.msra.mxu0 0.0
        %1190 = vmatprep.subr.mxu0 0.0
        %1191 = vmatpush1.xpose.msra.mxu0 0.0
        %1192 = vmatprep.subr.mxu0 0.0
        %1193 = vmatpush1.xpose.msra.mxu0 0.0
        %1194 = vmatprep.subr.mxu0 0.0
        %1195 = vmatpush1.xpose.msra.mxu0 0.0
        %1196 = vmatprep.subr.mxu0 0.0
        %1197 = vmatpush1.xpose.msra.mxu0 0.0
        %1198 = vmatprep.subr.mxu0 0.0
        %1199 = vmatpush1.xpose.msra.mxu0 0.0
        %1200 = vmatprep.subr.mxu0 0.0
        %1201 = vmatpush1.xpose.msra.mxu0 0.0
        %1202 = vmatprep.subr.mxu0 0.0
        %1203 = vmatpush1.xpose.msra.mxu0 0.0
        %1204 = vmatprep.subr.mxu0 0.0
        %1205 = vmatpush1.xpose.msra.mxu0 0.0
        %1206 = vmatprep.subr.mxu0 0.0
        %1207 = vmatpush1.xpose.msra.mxu0 0.0
        %1208 = vmatprep.subr.mxu0 0.0
        %1209 = vmatpush1.xpose.msra.mxu0 0.0
        %1210 = vmatprep.mubr.f32.mxu0 0.0
        %1211 = vmatmul.mubr.f32.gmra.mrb[0].mxu0 %v1142
        %v1212 = vpop.f32.mrb[0].mxu0
        %v1213 = vadd.f32 0.0, %v1212
        %v1214 = vpop.f32.mrb[0].mxu0
        %1215 = vdwg.mxu0
        %v1216 = vsel %vm806, %v1213, -inf
        %v1217 = vsel %vm810, %v1216, -inf
        %1218 = vmax.xlane.f32.xlu0 %v1217
        %v1219 = vpop.xlane.xlu0 %1218
        %v1220 = vsub.f32 %v1216, %v1219
        %v1221 = vmul.f32 %v1220, 1.442695
        %v1222 = vpow.pop %v1221
        %v1223 = vsel %vm810, %v1222, 0.0
        %1224 = vadd.xlane.f32.xlu0 %v1223
        %v1225 = vpop.xlane.xlu0 %1224
        %v1226 = vrcp.pop %v1225
        %v1227 = vmul.f32 %v1222, %v1226
        %1228 = vrot.lane.b32.xlu0 %v772, 112
        %v1229 = vpop.permute.xlu0 %1228
        %v1232 = vsel %vm810, %v1227, 0
        %1234 = vmatprep.subr.mxu0 0.0
        %1235 = vmatpush1.msra.mxu0 %v1229
        %1236 = vmatprep.subr.mxu0 0.0
        %1237 = vmatpush1.msra.mxu0 0.0
        %1238 = vmatprep.subr.mxu0 0.0
        %1239 = vmatpush1.msra.mxu0 0.0
        %1240 = vmatprep.subr.mxu0 0.0
        %1241 = vmatpush1.msra.mxu0 0.0
        %1242 = vmatprep.subr.mxu0 0.0
        %1243 = vmatpush1.msra.mxu0 0.0
        %1244 = vmatprep.subr.mxu0 0.0
        %1245 = vmatpush1.msra.mxu0 0.0
        %1246 = vmatprep.subr.mxu0 0.0
        %1247 = vmatpush1.msra.mxu0 0.0
        %1248 = vmatprep.subr.mxu0 0.0
        %1249 = vmatpush1.msra.mxu0 0.0
        %1250 = vmatprep.subr.mxu0 0.0
        %1251 = vmatpush1.msra.mxu0 0.0
        %1252 = vmatprep.subr.mxu0 0.0
        %1253 = vmatpush1.msra.mxu0 0.0
        %1254 = vmatprep.subr.mxu0 0.0
        %1255 = vmatpush1.msra.mxu0 0.0
        %1256 = vmatprep.subr.mxu0 0.0
        %1257 = vmatpush1.msra.mxu0 0.0
        %1258 = vmatprep.subr.mxu0 0.0
        %1259 = vmatpush1.msra.mxu0 0.0
        %1260 = vmatprep.subr.mxu0 0.0
        %1261 = vmatpush1.msra.mxu0 0.0
        %1262 = vmatprep.subr.mxu0 0.0
        %1263 = vmatpush1.msra.mxu0 0.0
        %1264 = vmatprep.subr.mxu0 0.0
        %1265 = vmatpush1.msra.mxu0 0.0
        %1266 = vmatprep.subr.mxu0 0.0
        %1267 = vmatpush1.msra.mxu0 0.0
        %1268 = vmatprep.subr.mxu0 0.0
        %1269 = vmatpush1.msra.mxu0 0.0
        %1270 = vmatprep.subr.mxu0 0.0
        %1271 = vmatpush1.msra.mxu0 0.0
        %1272 = vmatprep.subr.mxu0 0.0
        %1273 = vmatpush1.msra.mxu0 0.0
        %1274 = vmatprep.subr.mxu0 0.0
        %1275 = vmatpush1.msra.mxu0 0.0
        %1276 = vmatprep.subr.mxu0 0.0
        %1277 = vmatpush1.msra.mxu0 0.0
        %1278 = vmatprep.subr.mxu0 0.0
        %1279 = vmatpush1.msra.mxu0 0.0
        %1280 = vmatprep.subr.mxu0 0.0
        %1281 = vmatpush1.msra.mxu0 0.0
        %1282 = vmatprep.subr.mxu0 0.0
        %1283 = vmatpush1.msra.mxu0 0.0
        %1284 = vmatprep.subr.mxu0 0.0
        %1285 = vmatpush1.msra.mxu0 0.0
        %1286 = vmatprep.subr.mxu0 0.0
        %1287 = vmatpush1.msra.mxu0 0.0
        %1288 = vmatprep.subr.mxu0 0.0
        %1289 = vmatpush1.msra.mxu0 0.0
        %1290 = vmatprep.subr.mxu0 0.0
        %1291 = vmatpush1.msra.mxu0 0.0
        %1292 = vmatprep.subr.mxu0 0.0
        %1293 = vmatpush1.msra.mxu0 0.0
        %1294 = vmatprep.subr.mxu0 0.0
        %1295 = vmatpush1.msra.mxu0 0.0
        %1296 = vmatprep.subr.mxu0 0.0
        %1297 = vmatpush1.msra.mxu0 0.0
        %1298 = vmatprep.mubr.f32.mxu0 0.0
        %1299 = vmatmul.mubr.f32.gmra.mrb[0].mxu0 %v1232
        %v1300 = vpop.f32.mrb[0].mxu0
        %v1301 = vadd.f32 0.0, %v1300
        %v1302 = vpop.f32.mrb[0].mxu0
        %1303 = vdwg.mxu0
        %1304 = vrot.lane.b32.xlu0 %v787, 104
        %v1305 = vpop.permute.xlu0 %1304
        %1306 = vrot.lane.b32.xlu0 %v801, 40
        %v1307 = vpop.permute.xlu0 %1306
        %v1308 = vsel %vm810, %v1305, 0
        %v1310 = vsel %vm810, %v1307, 0
        %1312 = vmatprep.subr.mxu0 0.0
        %1313 = vmatpush1.xpose.msra.mxu0 %v1310
        %1314 = vmatprep.subr.mxu0 0.0
        %1315 = vmatpush1.xpose.msra.mxu0 0.0
        %1316 = vmatprep.subr.mxu0 0.0
        %1317 = vmatpush1.xpose.msra.mxu0 0.0
        %1318 = vmatprep.subr.mxu0 0.0
        %1319 = vmatpush1.xpose.msra.mxu0 0.0
        %1320 = vmatprep.subr.mxu0 0.0
        %1321 = vmatpush1.xpose.msra.mxu0 0.0
        %1322 = vmatprep.subr.mxu0 0.0
        %1323 = vmatpush1.xpose.msra.mxu0 0.0
        %1324 = vmatprep.subr.mxu0 0.0
        %1325 = vmatpush1.xpose.msra.mxu0 0.0
        %1326 = vmatprep.subr.mxu0 0.0
        %1327 = vmatpush1.xpose.msra.mxu0 0.0
        %1328 = vmatprep.subr.mxu0 0.0
        %1329 = vmatpush1.xpose.msra.mxu0 0.0
        %1330 = vmatprep.subr.mxu0 0.0
        %1331 = vmatpush1.xpose.msra.mxu0 0.0
        %1332 = vmatprep.subr.mxu0 0.0
        %1333 = vmatpush1.xpose.msra.mxu0 0.0
        %1334 = vmatprep.subr.mxu0 0.0
        %1335 = vmatpush1.xpose.msra.mxu0 0.0
        %1336 = vmatprep.subr.mxu0 0.0
        %1337 = vmatpush1.xpose.msra.mxu0 0.0
        %1338 = vmatprep.subr.mxu0 0.0
        %1339 = vmatpush1.xpose.msra.mxu0 0.0
        %1340 = vmatprep.subr.mxu0 0.0
        %1341 = vmatpush1.xpose.msra.mxu0 0.0
        %1342 = vmatprep.subr.mxu0 0.0
        %1343 = vmatpush1.xpose.msra.mxu0 0.0
        %1344 = vmatprep.subr.mxu0 0.0
        %1345 = vmatpush1.xpose.msra.mxu0 0.0
        %1346 = vmatprep.subr.mxu0 0.0
        %1347 = vmatpush1.xpose.msra.mxu0 0.0
        %1348 = vmatprep.subr.mxu0 0.0
        %1349 = vmatpush1.xpose.msra.mxu0 0.0
        %1350 = vmatprep.subr.mxu0 0.0
        %1351 = vmatpush1.xpose.msra.mxu0 0.0
        %1352 = vmatprep.subr.mxu0 0.0
        %1353 = vmatpush1.xpose.msra.mxu0 0.0
        %1354 = vmatprep.subr.mxu0 0.0
        %1355 = vmatpush1.xpose.msra.mxu0 0.0
        %1356 = vmatprep.subr.mxu0 0.0
        %1357 = vmatpush1.xpose.msra.mxu0 0.0
        %1358 = vmatprep.subr.mxu0 0.0
        %1359 = vmatpush1.xpose.msra.mxu0 0.0
        %1360 = vmatprep.subr.mxu0 0.0
        %1361 = vmatpush1.xpose.msra.mxu0 0.0
        %1362 = vmatprep.subr.mxu0 0.0
        %1363 = vmatpush1.xpose.msra.mxu0 0.0
        %1364 = vmatprep.subr.mxu0 0.0
        %1365 = vmatpush1.xpose.msra.mxu0 0.0
        %1366 = vmatprep.subr.mxu0 0.0
        %1367 = vmatpush1.xpose.msra.mxu0 0.0
        %1368 = vmatprep.subr.mxu0 0.0
        %1369 = vmatpush1.xpose.msra.mxu0 0.0
        %1370 = vmatprep.subr.mxu0 0.0
        %1371 = vmatpush1.xpose.msra.mxu0 0.0
        %1372 = vmatprep.subr.mxu0 0.0
        %1373 = vmatpush1.xpose.msra.mxu0 0.0
        %1374 = vmatprep.subr.mxu0 0.0
        %1375 = vmatpush1.xpose.msra.mxu0 0.0
        %1376 = vmatprep.mubr.f32.mxu0 0.0
        %1377 = vmatmul.mubr.f32.gmra.mrb[0].mxu0 %v1308
        %v1378 = vpop.f32.mrb[0].mxu0
        %v1379 = vadd.f32 0.0, %v1378
        %v1380 = vpop.f32.mrb[0].mxu0
        %1381 = vdwg.mxu0
        %v1382 = vsel %vm806, %v1379, -inf
        %v1383 = vsel %vm810, %v1382, -inf
        %1384 = vmax.xlane.f32.xlu0 %v1383
        %v1385 = vpop.xlane.xlu0 %1384
        %v1386 = vsub.f32 %v1382, %v1385
        %v1387 = vmul.f32 %v1386, 1.442695
        %v1388 = vpow.pop %v1387
        %v1389 = vsel %vm810, %v1388, 0.0
        %1390 = vadd.xlane.f32.xlu0 %v1389
        %v1391 = vpop.xlane.xlu0 %1390
        %v1392 = vrcp.pop %v1391
        %v1393 = vmul.f32 %v1388, %v1392
        %1394 = vrot.lane.b32.xlu0 %v772, 104
        %v1395 = vpop.permute.xlu0 %1394
        %v1398 = vsel %vm810, %v1393, 0
        %1400 = vmatprep.subr.mxu0 0.0
        %1401 = vmatpush1.msra.mxu0 %v1395
        %1402 = vmatprep.subr.mxu0 0.0
        %1403 = vmatpush1.msra.mxu0 0.0
        %1404 = vmatprep.subr.mxu0 0.0
        %1405 = vmatpush1.msra.mxu0 0.0
        %1406 = vmatprep.subr.mxu0 0.0
        %1407 = vmatpush1.msra.mxu0 0.0
        %1408 = vmatprep.subr.mxu0 0.0
        %1409 = vmatpush1.msra.mxu0 0.0
        %1410 = vmatprep.subr.mxu0 0.0
        %1411 = vmatpush1.msra.mxu0 0.0
        %1412 = vmatprep.subr.mxu0 0.0
        %1413 = vmatpush1.msra.mxu0 0.0
        %1414 = vmatprep.subr.mxu0 0.0
        %1415 = vmatpush1.msra.mxu0 0.0
        %1416 = vmatprep.subr.mxu0 0.0
        %1417 = vmatpush1.msra.mxu0 0.0
        %1418 = vmatprep.subr.mxu0 0.0
        %1419 = vmatpush1.msra.mxu0 0.0
        %1420 = vmatprep.subr.mxu0 0.0
        %1421 = vmatpush1.msra.mxu0 0.0
        %1422 = vmatprep.subr.mxu0 0.0
        %1423 = vmatpush1.msra.mxu0 0.0
        %1424 = vmatprep.subr.mxu0 0.0
        %1425 = vmatpush1.msra.mxu0 0.0
        %1426 = vmatprep.subr.mxu0 0.0
        %1427 = vmatpush1.msra.mxu0 0.0
        %1428 = vmatprep.subr.mxu0 0.0
        %1429 = vmatpush1.msra.mxu0 0.0
        %1430 = vmatprep.subr.mxu0 0.0
        %1431 = vmatpush1.msra.mxu0 0.0
        %1432 = vmatprep.subr.mxu0 0.0
        %1433 = vmatpush1.msra.mxu0 0.0
        %1434 = vmatprep.subr.mxu0 0.0
        %1435 = vmatpush1.msra.mxu0 0.0
        %1436 = vmatprep.subr.mxu0 0.0
        %1437 = vmatpush1.msra.mxu0 0.0
        %1438 = vmatprep.subr.mxu0 0.0
        %1439 = vmatpush1.msra.mxu0 0.0
        %1440 = vmatprep.subr.mxu0 0.0
        %1441 = vmatpush1.msra.mxu0 0.0
        %1442 = vmatprep.subr.mxu0 0.0
        %1443 = vmatpush1.msra.mxu0 0.0
        %1444 = vmatprep.subr.mxu0 0.0
        %1445 = vmatpush1.msra.mxu0 0.0
        %1446 = vmatprep.subr.mxu0 0.0
        %1447 = vmatpush1.msra.mxu0 0.0
        %1448 = vmatprep.subr.mxu0 0.0
        %1449 = vmatpush1.msra.mxu0 0.0
        %1450 = vmatprep.subr.mxu0 0.0
        %1451 = vmatpush1.msra.mxu0 0.0
        %1452 = vmatprep.subr.mxu0 0.0
        %1453 = vmatpush1.msra.mxu0 0.0
        %1454 = vmatprep.subr.mxu0 0.0
        %1455 = vmatpush1.msra.mxu0 0.0
        %1456 = vmatprep.subr.mxu0 0.0
        %1457 = vmatpush1.msra.mxu0 0.0
        %1458 = vmatprep.subr.mxu0 0.0
        %1459 = vmatpush1.msra.mxu0 0.0
        %1460 = vmatprep.subr.mxu0 0.0
        %1461 = vmatpush1.msra.mxu0 0.0
        %1462 = vmatprep.subr.mxu0 0.0
        %1463 = vmatpush1.msra.mxu0 0.0
        %1464 = vmatprep.mubr.f32.mxu0 0.0
        %1465 = vmatmul.mubr.f32.gmra.mrb[0].mxu0 %v1398
        %v1466 = vpop.f32.mrb[0].mxu0
        %v1467 = vadd.f32 0.0, %v1466
        %v1468 = vpop.f32.mrb[0].mxu0
        %1469 = vdwg.mxu0
        %1471 = vrot.lane.b32.xlu0 %v1135, 8
        %v1472 = vpop.permute.xlu0 %1471
        %1475 = vrot.lane.b32.xlu0 %v1301, 16
        %v1476 = vpop.permute.xlu0 %1475
        %1479 = vrot.lane.b32.xlu0 %v1467, 24
        %v1480 = vpop.permute.xlu0 %1479
        %v1482 = vsel %vm810, %v968, %v1472
        %vm1483 = vcmask 130048
        %v1484 = vsel %vm1483, %v1482, %v1476
        %vm1485 = vcmask 195584
        %v1486 = vsel %vm1485, %v1484, %v1480
        %v1487 = vld [vmem:[%s627] sm:$0xff]
        %v1488 = vld [vmem:[%s627 + $0x8] sm:$0xff]
        %v1489 = vld [vmem:[%s627 + $0x10] sm:$0xff]
        %v1490 = vld [vmem:[%s627 + $0x18] sm:$0xff]
        %v1492 = vsel %vm663, %v1486, 0
        %1494 = vmatprep.subr.mxu0 0.0
        %1495 = vmatpush1.msra.mxu0 %v1487
        %1496 = vmatprep.subr.mxu0 0.0
        %1497 = vmatpush1.msra.mxu0 %v1488
        %1498 = vmatprep.subr.mxu0 0.0
        %1499 = vmatpush1.msra.mxu0 %v1489
        %1500 = vmatprep.subr.mxu0 0.0
        %1501 = vmatpush1.msra.mxu0 %v1490
        %1502 = vmatprep.subr.mxu0 0.0
        %1503 = vmatpush1.msra.mxu0 0.0
        %1504 = vmatprep.subr.mxu0 0.0
        %1505 = vmatpush1.msra.mxu0 0.0
        %1506 = vmatprep.subr.mxu0 0.0
        %1507 = vmatpush1.msra.mxu0 0.0
        %1508 = vmatprep.subr.mxu0 0.0
        %1509 = vmatpush1.msra.mxu0 0.0
        %1510 = vmatprep.subr.mxu0 0.0
        %1511 = vmatpush1.msra.mxu0 0.0
        %1512 = vmatprep.subr.mxu0 0.0
        %1513 = vmatpush1.msra.mxu0 0.0
        %1514 = vmatprep.subr.mxu0 0.0
        %1515 = vmatpush1.msra.mxu0 0.0
        %1516 = vmatprep.subr.mxu0 0.0
        %1517 = vmatpush1.msra.mxu0 0.0
        %1518 = vmatprep.subr.mxu0 0.0
        %1519 = vmatpush1.msra.mxu0 0.0
        %1520 = vmatprep.subr.mxu0 0.0
        %1521 = vmatpush1.msra.mxu0 0.0
        %1522 = vmatprep.subr.mxu0 0.0
        %1523 = vmatpush1.msra.mxu0 0.0
        %1524 = vmatprep.subr.mxu0 0.0
        %1525 = vmatpush1.msra.mxu0 0.0
        %1526 = vmatprep.subr.mxu0 0.0
        %1527 = vmatpush1.msra.mxu0 0.0
        %1528 = vmatprep.subr.mxu0 0.0
        %1529 = vmatpush1.msra.mxu0 0.0
        %1530 = vmatprep.subr.mxu0 0.0
        %1531 = vmatpush1.msra.mxu0 0.0
        %1532 = vmatprep.subr.mxu0 0.0
        %1533 = vmatpush1.msra.mxu0 0.0
        %1534 = vmatprep.subr.mxu0 0.0
        %1535 = vmatpush1.msra.mxu0 0.0
        %1536 = vmatprep.subr.mxu0 0.0
        %1537 = vmatpush1.msra.mxu0 0.0
        %1538 = vmatprep.subr.mxu0 0.0
        %1539 = vmatpush1.msra.mxu0 0.0
        %1540 = vmatprep.subr.mxu0 0.0
        %1541 = vmatpush1.msra.mxu0 0.0
        %1542 = vmatprep.subr.mxu0 0.0
        %1543 = vmatpush1.msra.mxu0 0.0
        %1544 = vmatprep.subr.mxu0 0.0
        %1545 = vmatpush1.msra.mxu0 0.0
        %1546 = vmatprep.subr.mxu0 0.0
        %1547 = vmatpush1.msra.mxu0 0.0
        %1548 = vmatprep.subr.mxu0 0.0
        %1549 = vmatpush1.msra.mxu0 0.0
        %1550 = vmatprep.subr.mxu0 0.0
        %1551 = vmatpush1.msra.mxu0 0.0
        %1552 = vmatprep.subr.mxu0 0.0
        %1553 = vmatpush1.msra.mxu0 0.0
        %1554 = vmatprep.subr.mxu0 0.0
        %1555 = vmatpush1.msra.mxu0 0.0
        %1556 = vmatprep.subr.mxu0 0.0
        %1557 = vmatpush1.msra.mxu0 0.0
        %1558 = vmatprep.mubr.f32.mxu0 0.0
        %1559 = vmatmul.mubr.f32.gmra.mrb[0].mxu0 %v1492
        %v1560 = vpop.f32.mrb[0].mxu0
        %v1561 = vadd.f32 0.0, %v1560
        %v1562 = vpop.f32.mrb[0].mxu0
        %1563 = vdwg.mxu0
        %v1564 = vadd.f32 %v660, %v1561
        %v1565 = vld [vmem:[%s630] sm:$0x1]
        %v1567 = vlaneseq
        %v1568 = vshrl.u32 %v1567, 7
        %v1569 = vsub.s32 0, %v1568
        %v1570 = vrot.slane %v1565, %v1569
        %v1572 = vadd.f32 %v1564, %v1570
        %v1573 = vld [vmem:[%s633] sm:$0x1]
        %v1574 = vld [vmem:[%s636] sm:$0x1]
        %v1575 = vsel %vm663, %v1572, 0.0
        %1576 = vadd.xlane.f32.xlu0 %v1575
        %v1577 = vpop.xlane.xlu0 %1576
        %v1578 = vmul.f32 %v1577, %v667
        %v1579 = vsub.f32 %v1572, %v1578
        %v1580 = vmul.f32 %v1579, %v1579
        %v1581 = vsel %vm663, %v1580, 0.0
        %1582 = vadd.xlane.f32.xlu0 %v1581
        %v1583 = vpop.xlane.xlu0 %1582
        %v1584 = vmul.f32 %v1583, %v667
        %v1585 = vadd.f32 %v1584, 1e-05
        %v1586 = vrsqrt.pop %v1585
        %v1587 = vmul.f32 %v1579, %v1586
        %v1589 = vlaneseq
        %v1590 = vshrl.u32 %v1589, 7
        %v1591 = vsub.s32 0, %v1590
        %v1592 = vrot.slane %v1573, %v1591
        %v1594 = vmul.f32 %v1587, %v1592
        %v1596 = vlaneseq
        %v1597 = vshrl.u32 %v1596, 7
        %v1598 = vsub.s32 0, %v1597
        %v1599 = vrot.slane %v1574, %v1598
        %v1601 = vadd.f32 %v1594, %v1599
        %v1602 = vld [vmem:[%s641] sm:$0xff]
        %v1603 = vld [vmem:[%s641 + $0x8] sm:$0xff]
        %v1604 = vld [vmem:[%s641 + $0x10] sm:$0xff]
        %v1605 = vld [vmem:[%s641 + $0x18] sm:$0xff]
        %v1606 = vld [vmem:[%s644] sm:$0x1]
        %v1608 = vlaneseq
        %v1609 = vshrl.u32 %v1608, 7
        %v1610 = vsub.s32 0, %v1609
        %v1611 = vrot.slane %v1606, %v1610
        %v1614 = vsel %vm663, %v1601, 0
        %1616 = vmatprep.subr.mxu0 0.0
        %1617 = vmatpush1.msra.mxu0 %v1602
        %1618 = vmatprep.subr.mxu0 0.0
        %1619 = vmatpush1.msra.mxu0 %v1603
        %1620 = vmatprep.subr.mxu0 0.0
        %1621 = vmatpush1.msra.mxu0 %v1604
        %1622 = vmatprep.subr.mxu0 0.0
        %1623 = vmatpush1.msra.mxu0 %v1605
        %1624 = vmatprep.subr.mxu0 0.0
        %1625 = vmatpush1.msra.mxu0 0.0
        %1626 = vmatprep.subr.mxu0 0.0
        %1627 = vmatpush1.msra.mxu0 0.0
        %1628 = vmatprep.subr.mxu0 0.0
        %1629 = vmatpush1.msra.mxu0 0.0
        %1630 = vmatprep.subr.mxu0 0.0
        %1631 = vmatpush1.msra.mxu0 0.0
        %1632 = vmatprep.subr.mxu0 0.0
        %1633 = vmatpush1.msra.mxu0 0.0
        %1634 = vmatprep.subr.mxu0 0.0
        %1635 = vmatpush1.msra.mxu0 0.0
        %1636 = vmatprep.subr.mxu0 0.0
        %1637 = vmatpush1.msra.mxu0 0.0
        %1638 = vmatprep.subr.mxu0 0.0
        %1639 = vmatpush1.msra.mxu0 0.0
        %1640 = vmatprep.subr.mxu0 0.0
        %1641 = vmatpush1.msra.mxu0 0.0
        %1642 = vmatprep.subr.mxu0 0.0
        %1643 = vmatpush1.msra.mxu0 0.0
        %1644 = vmatprep.subr.mxu0 0.0
        %1645 = vmatpush1.msra.mxu0 0.0
        %1646 = vmatprep.subr.mxu0 0.0
        %1647 = vmatpush1.msra.mxu0 0.0
        %1648 = vmatprep.subr.mxu0 0.0
        %1649 = vmatpush1.msra.mxu0 0.0
        %1650 = vmatprep.subr.mxu0 0.0
        %1651 = vmatpush1.msra.mxu0 0.0
        %1652 = vmatprep.subr.mxu0 0.0
        %1653 = vmatpush1.msra.mxu0 0.0
        %1654 = vmatprep.subr.mxu0 0.0
        %1655 = vmatpush1.msra.mxu0 0.0
        %1656 = vmatprep.subr.mxu0 0.0
        %1657 = vmatpush1.msra.mxu0 0.0
        %1658 = vmatprep.subr.mxu0 0.0
        %1659 = vmatpush1.msra.mxu0 0.0
        %1660 = vmatprep.subr.mxu0 0.0
        %1661 = vmatpush1.msra.mxu0 0.0
        %1662 = vmatprep.subr.mxu0 0.0
        %1663 = vmatpush1.msra.mxu0 0.0
        %1664 = vmatprep.subr.mxu0 0.0
        %1665 = vmatpush1.msra.mxu0 0.0
        %1666 = vmatprep.subr.mxu0 0.0
        %1667 = vmatpush1.msra.mxu0 0.0
        %1668 = vmatprep.subr.mxu0 0.0
        %1669 = vmatpush1.msra.mxu0 0.0
        %1670 = vmatprep.subr.mxu0 0.0
        %1671 = vmatpush1.msra.mxu0 0.0
        %1672 = vmatprep.subr.mxu0 0.0
        %1673 = vmatpush1.msra.mxu0 0.0
        %1674 = vmatprep.subr.mxu0 0.0
        %1675 = vmatpush1.msra.mxu0 0.0
        %1676 = vmatprep.subr.mxu0 0.0
        %1677 = vmatpush1.msra.mxu0 0.0
        %1678 = vmatprep.subr.mxu0 0.0
        %1679 = vmatpush1.msra.mxu0 0.0
        %1680 = vmatprep.mubr.f32.mxu0 0.0
        %1681 = vmatmul.mubr.f32.gmra.mrb[0].mxu0 %v1614
        %v1682 = vpop.f32.mrb[0].mxu0
        %v1683 = vadd.f32 %v1611, %v1682
        %v1684 = vpop.f32.mrb[0].mxu0
        %1685 = vdwg.mxu0
        %v1686 = vmax.f32 %v1683, 0.0
        %v1687 = vld [vmem:[%s649] sm:$0xff]
        %v1688 = vld [vmem:[%s649 + $0x8] sm:$0xff]
        %v1689 = vld [vmem:[%s649 + $0x10] sm:$0xff]
        %v1690 = vld [vmem:[%s649 + $0x18] sm:$0xff]
        %v1691 = vld [vmem:[%s649 + $0x20] sm:$0xff]
        %v1692 = vld [vmem:[%s649 + $0x28] sm:$0xff]
        %v1693 = vld [vmem:[%s649 + $0x30] sm:$0xff]
        %v1694 = vld [vmem:[%s649 + $0x38] sm:$0xff]
        %v1695 = vld [vmem:[%s649 + $0x40] sm:$0xff]
        %v1696 = vld [vmem:[%s649 + $0x48] sm:$0xff]
        %v1697 = vld [vmem:[%s649 + $0x50] sm:$0xff]
        %v1698 = vld [vmem:[%s649 + $0x58] sm:$0xff]
        %v1699 = vld [vmem:[%s649 + $0x60] sm:$0xff]
        %v1700 = vld [vmem:[%s649 + $0x68] sm:$0xff]
        %v1701 = vld [vmem:[%s649 + $0x70] sm:$0xff]
        %v1702 = vld [vmem:[%s649 + $0x78] sm:$0xff]
        %1703 = vmatprep.subr.mxu0 0.0
        %1704 = vmatpush1.msra.mxu0 %v1687
        %1705 = vmatprep.subr.mxu0 0.0
        %1706 = vmatpush1.msra.mxu0 %v1688
        %1707 = vmatprep.subr.mxu0 0.0
        %1708 = vmatpush1.msra.mxu0 %v1689
        %1709 = vmatprep.subr.mxu0 0.0
        %1710 = vmatpush1.msra.mxu0 %v1690
        %1711 = vmatprep.subr.mxu0 0.0
        %1712 = vmatpush1.msra.mxu0 %v1691
        %1713 = vmatprep.subr.mxu0 0.0
        %1714 = vmatpush1.msra.mxu0 %v1692
        %1715 = vmatprep.subr.mxu0 0.0
        %1716 = vmatpush1.msra.mxu0 %v1693
        %1717 = vmatprep.subr.mxu0 0.0
        %1718 = vmatpush1.msra.mxu0 %v1694
        %1719 = vmatprep.subr.mxu0 0.0
        %1720 = vmatpush1.msra.mxu0 %v1695
        %1721 = vmatprep.subr.mxu0 0.0
        %1722 = vmatpush1.msra.mxu0 %v1696
        %1723 = vmatprep.subr.mxu0 0.0
        %1724 = vmatpush1.msra.mxu0 %v1697
        %1725 = vmatprep.subr.mxu0 0.0
        %1726 = vmatpush1.msra.mxu0 %v1698
        %1727 = vmatprep.subr.mxu0 0.0
        %1728 = vmatpush1.msra.mxu0 %v1699
        %1729 = vmatprep.subr.mxu0 0.0
        %1730 = vmatpush1.msra.mxu0 %v1700
        %1731 = vmatprep.subr.mxu0 0.0
        %1732 = vmatpush1.msra.mxu0 %v1701
        %1733 = vmatprep.subr.mxu0 0.0
        %1734 = vmatpush1.msra.mxu0 %v1702
        %1735 = vmatprep.subr.mxu0 0.0
        %1736 = vmatpush1.msra.mxu0 0.0
        %1737 = vmatprep.subr.mxu0 0.0
        %1738 = vmatpush1.msra.mxu0 0.0
        %1739 = vmatprep.subr.mxu0 0.0
        %1740 = vmatpush1.msra.mxu0 0.0
        %1741 = vmatprep.subr.mxu0 0.0
        %1742 = vmatpush1.msra.mxu0 0.0
        %1743 = vmatprep.subr.mxu0 0.0
        %1744 = vmatpush1.msra.mxu0 0.0
        %1745 = vmatprep.subr.mxu0 0.0
        %1746 = vmatpush1.msra.mxu0 0.0
        %1747 = vmatprep.subr.mxu0 0.0
        %1748 = vmatpush1.msra.mxu0 0.0
        %1749 = vmatprep.subr.mxu0 0.0
        %1750 = vmatpush1.msra.mxu0 0.0
        %1751 = vmatprep.subr.mxu0 0.0
        %1752 = vmatpush1.msra.mxu0 0.0
        %1753 = vmatprep.subr.mxu0 0.0
        %1754 = vmatpush1.msra.mxu0 0.0
        %1755 = vmatprep.subr.mxu0 0.0
        %1756 = vmatpush1.msra.mxu0 0.0
        %1757 = vmatprep.subr.mxu0 0.0
        %1758 = vmatpush1.msra.mxu0 0.0
        %1759 = vmatprep.subr.mxu0 0.0
        %1760 = vmatpush1.msra.mxu0 0.0
        %1761 = vmatprep.subr.mxu0 0.0
        %1762 = vmatpush1.msra.mxu0 0.0
        %1763 = vmatprep.subr.mxu0 0.0
        %1764 = vmatpush1.msra.mxu0 0.0
        %1765 = vmatprep.subr.mxu0 0.0
        %1766 = vmatpush1.msra.mxu0 0.0
        %1767 = vmatprep.mubr.f32.mxu0 0.0
        %1768 = vmatmul.mubr.f32.gmra.mrb[0].mxu0 %v1686
        %v1769 = vpop.f32.mrb[0].mxu0
        %v1770 = vadd.f32 0.0, %v1769
        %v1771 = vpop.f32.mrb[0].mxu0
        %1772 = vdwg.mxu0
        %v1773 = vadd.f32 %v1572, %v1770
        %v1774 = vld [vmem:[%s652] sm:$0x1]
        %v1776 = vlaneseq
        %v1777 = vshrl.u32 %v1776, 7
        %v1778 = vsub.s32 0, %v1777
        %v1779 = vrot.slane %v1774, %v1778
        %v1781 = vadd.f32 %v1773, %v1779
        %1782 = vst.msk [vmem:[%s607] sm:$0xff] %vm663, %v1781
        %s1783 = sand.u32 %s402, 1
        %s1784 = scalar_lea.sflag [#allocation3], %s1783
        %s1785 = sand.u32 %s402, 1
        %s1786 = smul.addr %s1785, 8
        %s1787 = scalar_lea.vmem [#allocation2], %s1786
        // Predicated region
        $region81: #{tpu_custom_call.1} parent=75 // pred_check
          %p1788 = pneg %p412
        $region82: #{tpu_custom_call.1} parent=75 // pred_check_branch
          %1790 = sbr.rel (%p1788) target = $region84
        $region83: #{tpu_custom_call.1} parent=75 // pred_region
          %s1792 = ssub.s32 128, 128
          %1793 = vsyncadd %s1784, %s1792
          %s1794 = smul.addr %s32, 128
          %s1795 = scalar_lea.hbm %s14, %s1794
          %s1797 = sshll.u32 %s1787, 4
          %s1798 = int_to_ptr.vmem [resolvable:$true] %s1797
          %1800 = dma.vmem_to_hbm [thread:$0]  %s1798, 128, %s1795, %s1784
        $region84: #{tpu_custom_call.1} parent=75 // pred_fallthru
          _
      $region76: #{tpu_custom_call.1} parent=5 // pred_fallthru
        _
      %p1801 = scmp.le.s32.totalorder 2, %s23
      // Predicated region
      $region85: #{tpu_custom_call.1} parent=5 // pred_check
        %p1802 = pneg %p1801
      $region86: #{tpu_custom_call.1} parent=5 // pred_check_branch
        %1804 = sbr.rel (%p1802) target = $region88
      $region87: #{tpu_custom_call.1} parent=5 // pred_region
        %s1805 = ssub.s32 %s23, 2
        // Predicated region
        $region89: #{tpu_custom_call.1} parent=87 // pred_check
          %p1806 = pneg %p418
        $region90: #{tpu_custom_call.1} parent=87 // pred_check_branch
          %1808 = sbr.rel (%p1806) target = $region92
        $region91: #{tpu_custom_call.1} parent=87 // pred_region
          %s1809 = sand.u32 %s403, 1
          %s1810 = scalar_lea.sflag [#allocation3], %s1809
          %s1811 = sand.u32 %s403, 1
          %s1812 = smul.addr %s1811, 8
          %s1813 = scalar_lea.vmem [#allocation2], %s1812
          %1814 = dma.done %s1810, 128
        $region92: #{tpu_custom_call.1} parent=87 // pred_fallthru
          _
      $region88: #{tpu_custom_call.1} parent=5 // pred_fallthru
        _
    $region6: #{tpu_custom_call.1} parent=1 // loop_footer
      %s27 = sadd.s32 1, %s23
    $region7: #{tpu_custom_call.1} parent=1 // loop_footer_branch
      %22 = sbr.rel target = $region3
    $region8: #{tpu_custom_call.1} parent=1 // loop_exit
      _
    %1815 = vsyncpa [#allocation3], 1
    %s1816 = scalar_lea.sflag [#allocation3], 1
    %1817 = vsyncpa %s1816, 1

</llo_original>
